<compile_context>
chip_gen: v5e
topology: v5e:2x2
jax: 0.10.0
libtpu: 0.0.40
codegen_flags: <defaults>
</compile_context>

<pallas_src>
import functools
import math

import jax
import jax.numpy as jnp
from jax.experimental import pallas as pl
from jax.experimental.pallas import tpu as pltpu


# =====================  Pallas kernels  =====================

def _embed_kernel(feat_ref, mark_ref, tw_ref, mw_ref, pe_ref, o_ref):
    # token embedding: Conv1d(k=3, circular, no bias) folded into one matmul over
    # circularly-shifted features, fused with temporal linear and positional add.
    val = jnp.dot(feat_ref[...].astype(jnp.bfloat16), tw_ref[...],
                  preferred_element_type=jnp.float32)
    tmp = jnp.dot(mark_ref[...].astype(jnp.bfloat16), mw_ref[...],
                  preferred_element_type=jnp.float32)
    o_ref[...] = val + tmp + pe_ref[...]


def _encoder_layer_kernel(x_ref, wqkv_ref, wo_ref, bo_ref,
                          w1_ref, b1_ref, w2_ref, b2_ref,
                          n1g_ref, n1b_ref, n2g_ref, n2b_ref,
                          o_ref, *, H, dh, scale, eps):
    x = x_ref[...]                                           # [L, D] f32 (one batch)
    L, D = x.shape
    xb = x.astype(jnp.bfloat16)

    # fused qk / v projection: one [D, 2D] matmul
    qkv = jnp.dot(xb, wqkv_ref[...], preferred_element_type=jnp.float32)   # [L, 2D]
    qk = qkv[:, :D]
    v = qkv[:, D:]

    # shared-QK full attention over all heads of this batch element.
    # TODO(synk): LSH bucketing (bucket_size=4, n_hashes=4 random rotations) is
    # stochastic; replaced with exact full shared-QK attention that LSH approximates.
    row = jax.lax.broadcasted_iota(jnp.int32, (L, L), 0)
    col = jax.lax.broadcasted_iota(jnp.int32, (L, L), 1)
    self_mask = row == col

    head_outs = []
    for h in range(H):                                       # static unroll, H small
        q = qk[:, h * dh:(h + 1) * dh]                       # [L, dh]
        vv = v[:, h * dh:(h + 1) * dh]
        # Reformer shared-QK: keys = L2-normalized query projections (rsqrt -> EUP)
        k = q * jax.lax.rsqrt(jnp.sum(q * q, axis=-1, keepdims=True) + 1e-24)
        dots = jax.lax.dot_general(
            q.astype(jnp.bfloat16), k.astype(jnp.bfloat16),
            (((1,), (1,)), ((), ())),
            preferred_element_type=jnp.float32) * scale      # [L, L]
        dots = jnp.where(self_mask, -5e4, dots)              # TOKEN_SELF_ATTN_VALUE
        m = jnp.max(dots, axis=-1, keepdims=True)
        p = jnp.exp(dots - m)
        p = p * pl.reciprocal(jnp.sum(p, axis=-1, keepdims=True), approx=True)
        head_outs.append(jnp.dot(p.astype(jnp.bfloat16), vv.astype(jnp.bfloat16),
                                 preferred_element_type=jnp.float32))
    attn = jnp.concatenate(head_outs, axis=-1)               # [L, D]

    # output projection + bias, residual
    attn = jnp.dot(attn.astype(jnp.bfloat16), wo_ref[...],
                   preferred_element_type=jnp.float32) + bo_ref[...]
    x = x + attn

    # norm1
    mean1 = jnp.mean(x, axis=-1, keepdims=True)
    xc1 = x - mean1
    var1 = jnp.mean(xc1 * xc1, axis=-1, keepdims=True)
    x2 = xc1 * jax.lax.rsqrt(var1 + eps) * n1g_ref[...] + n1b_ref[...]

    # FFN (1x1 convs) fused: w1 + relu + w2, hidden stays on-chip
    h1 = jnp.dot(x2.astype(jnp.bfloat16), w1_ref[...],
                 preferred_element_type=jnp.float32) + b1_ref[...]
    h1 = jnp.maximum(h1, 0.0)
    y = jnp.dot(h1.astype(jnp.bfloat16), w2_ref[...],
                preferred_element_type=jnp.float32) + b2_ref[...]

    # norm2(x2 + y)
    z = x2 + y
    mean2 = jnp.mean(z, axis=-1, keepdims=True)
    zc = z - mean2
    var2 = jnp.mean(zc * zc, axis=-1, keepdims=True)
    o_ref[...] = zc * jax.lax.rsqrt(var2 + eps) * n2g_ref[...] + n2b_ref[...]


def _final_kernel(x_ref, g_ref, b_ref, pw_ref, pb_ref, sc_ref, sh_ref, o_ref, *, eps):
    # fused final LayerNorm + projection + instance de-normalization
    x = x_ref[...]
    mean = jnp.mean(x, axis=-1, keepdims=True)
    xc = x - mean
    var = jnp.mean(xc * xc, axis=-1, keepdims=True)
    xn = xc * jax.lax.rsqrt(var + eps) * g_ref[...] + b_ref[...]
    y = jnp.dot(xn.astype(jnp.bfloat16), pw_ref[...],
                preferred_element_type=jnp.float32) + pb_ref[...]
    o_ref[...] = y * sc_ref[...] + sh_ref[...]


# =====================  kernel wrappers  =====================

_PAR = pltpu.CompilerParams(dimension_semantics=("parallel",))


def pallas_embedding(feat2d, mark2d, token_w_bf16, temporal_w_bf16, pe, B, L, D):
    F3 = feat2d.shape[1]
    Mk = mark2d.shape[1]
    return pl.pallas_call(
        _embed_kernel,
        out_shape=jax.ShapeDtypeStruct((B * L, D), jnp.float32),
        grid=(B,),
        in_specs=[pl.BlockSpec((L, F3), lambda b: (b, 0)),
                  pl.BlockSpec((L, Mk), lambda b: (b, 0)),
                  pl.BlockSpec((F3, D), lambda b: (0, 0)),
                  pl.BlockSpec((Mk, D), lambda b: (0, 0)),
                  pl.BlockSpec((L, D), lambda b: (0, 0))],
        out_specs=pl.BlockSpec((L, D), lambda b: (b, 0)),
        compiler_params=_PAR,
    )(feat2d, mark2d, token_w_bf16, temporal_w_bf16, pe)


def pallas_encoder_layer(x2d, lp, B, L, D, H, eps=1e-5):
    dh = D // H
    Dff = lp["w1"].shape[1]
    kernel = functools.partial(_encoder_layer_kernel, H=H, dh=dh,
                               scale=float(dh) ** -0.5, eps=eps)
    wqkv = jnp.concatenate([lp["wqk"], lp["wv"]], axis=1).astype(jnp.bfloat16)

    def wspec(shape):
        return pl.BlockSpec(shape, lambda b: (0, 0))

    return pl.pallas_call(
        kernel,
        out_shape=jax.ShapeDtypeStruct((B * L, D), jnp.float32),
        grid=(B,),
        in_specs=[pl.BlockSpec((L, D), lambda b: (b, 0)),
                  wspec((D, 2 * D)), wspec((D, D)), wspec((1, D)),
                  wspec((D, Dff)), wspec((1, Dff)), wspec((Dff, D)), wspec((1, D)),
                  wspec((1, D)), wspec((1, D)), wspec((1, D)), wspec((1, D))],
        out_specs=pl.BlockSpec((L, D), lambda b: (b, 0)),
        compiler_params=_PAR,
    )(x2d, wqkv,
      lp["wo"].astype(jnp.bfloat16), lp["bo"].reshape(1, D),
      lp["w1"].astype(jnp.bfloat16), lp["b1"].reshape(1, Dff),
      lp["w2"].astype(jnp.bfloat16), lp["b2"].reshape(1, D),
      lp["n1_g"].reshape(1, D), lp["n1_b"].reshape(1, D),
      lp["n2_g"].reshape(1, D), lp["n2_b"].reshape(1, D))


def pallas_final(enc2d, g, b, pw_bf16, pb, scale_t, shift_t, B, L, D, c_out, eps=1e-5):
    return pl.pallas_call(
        functools.partial(_final_kernel, eps=eps),
        out_shape=jax.ShapeDtypeStruct((B * L, c_out), jnp.float32),
        grid=(B,),
        in_specs=[pl.BlockSpec((L, D), lambda i: (i, 0)),
                  pl.BlockSpec((1, D), lambda i: (0, 0)),
                  pl.BlockSpec((1, D), lambda i: (0, 0)),
                  pl.BlockSpec((D, c_out), lambda i: (0, 0)),
                  pl.BlockSpec((1, c_out), lambda i: (0, 0)),
                  pl.BlockSpec((L, c_out), lambda i: (i, 0)),
                  pl.BlockSpec((L, c_out), lambda i: (i, 0))],
        out_specs=pl.BlockSpec((L, c_out), lambda i: (i, 0)),
        compiler_params=_PAR,
    )(enc2d, g.reshape(1, D), b.reshape(1, D), pw_bf16,
      pb.reshape(1, c_out), scale_t, shift_t)


# =====================  parameters & glue  =====================

def init_params(key, cfg):
    def nrm(k, shape, scale=0.02):
        return scale * jax.random.normal(k, shape, dtype=jnp.float32)

    keys = iter(jax.random.split(key, 64))
    D, Dff, E, mark = cfg["d_model"], cfg["d_ff"], cfg["enc_in"], cfg["mark_dim"]
    p = {
        # TokenEmbedding Conv1d(E, D, k=3, circular, bias=False) folded to [3*E, D]
        "token_w": nrm(next(keys), (3 * E, D)),
        # TimeFeatureEmbedding Linear(mark, D, bias=False)
        "temporal_w": nrm(next(keys), (mark, D)),
        "norm_g": jnp.ones((D,), jnp.float32),
        "norm_b": jnp.zeros((D,), jnp.float32),
        "proj_w": nrm(next(keys), (D, cfg["c_out"])),
        "proj_b": jnp.zeros((cfg["c_out"],), jnp.float32),
    }
    layers = []
    for _ in range(cfg["e_layers"]):
        layers.append({
            "wqk": nrm(next(keys), (D, D)),
            "wv": nrm(next(keys), (D, D)),
            "wo": nrm(next(keys), (D, D)),
            "bo": jnp.zeros((D,), jnp.float32),
            "w1": nrm(next(keys), (D, Dff)),
            "b1": jnp.zeros((Dff,), jnp.float32),
            "w2": nrm(next(keys), (Dff, D)),
            "b2": jnp.zeros((D,), jnp.float32),
            "n1_g": jnp.ones((D,), jnp.float32), "n1_b": jnp.zeros((D,), jnp.float32),
            "n2_g": jnp.ones((D,), jnp.float32), "n2_b": jnp.zeros((D,), jnp.float32),
        })
    p["layers"] = layers
    return p


def positional_embedding(L, D):
    position = jnp.arange(L, dtype=jnp.float32)[:, None]
    div_term = jnp.exp(jnp.arange(0, D, 2, dtype=jnp.float32) * (-math.log(10000.0) / D))
    pe = jnp.zeros((L, D), jnp.float32)
    pe = pe.at[:, 0::2].set(jnp.sin(position * div_term))
    pe = pe.at[:, 1::2].set(jnp.cos(position * div_term))
    return pe


def model_forward(params, cfg, x_enc, x_mark_enc, x_dec, x_mark_dec):
    pred_len = cfg["pred_len"]
    D, H, c_out = cfg["d_model"], cfg["n_heads"], cfg["c_out"]
    B, _, E = x_enc.shape
    # the reference de-normalization (std_enc[:, :, -2:]) assumes c_out == 2 <= enc_in
    assert c_out == 2 and E >= 2

    # instance normalization (tiny glue reductions; unbiased=False like the reference)
    mean_enc = jnp.mean(x_enc, axis=1, keepdims=True)
    x_c = x_enc - mean_enc
    std_enc = jnp.sqrt(jnp.var(x_c, axis=1, keepdims=True) + 1e-5)
    x_n = x_c / std_enc
    x_full = jnp.concatenate([x_n, x_dec[:, -pred_len:, :]], axis=1)
    mark_full = jnp.concatenate([x_mark_enc, x_mark_dec[:, -pred_len:, :]], axis=1)

    L = x_full.shape[1]
    M = B * L

    # Conv1d kernel=3 circular padding == matmul over circularly shifted features
    feat = jnp.concatenate([jnp.roll(x_full, 1, axis=1), x_full,
                            jnp.roll(x_full, -1, axis=1)], axis=-1)
    feat2d = feat.reshape(M, 3 * E)
    mark2d = mark_full.reshape(M, mark_full.shape[-1])
    pe = positional_embedding(L, D)

    enc = pallas_embedding(feat2d, mark2d,
                           params["token_w"].astype(jnp.bfloat16),
                           params["temporal_w"].astype(jnp.bfloat16),
                           pe, B, L, D)                     # dropout identity in eval

    for lp in params["layers"]:
        enc = pallas_encoder_layer(enc, lp, B, L, D, H)

    scale_t = jnp.broadcast_to(std_enc[:, :, -2:], (B, L, c_out)).reshape(M, c_out)
    shift_t = jnp.broadcast_to(mean_enc[:, :, -2:], (B, L, c_out)).reshape(M, c_out)
    dec2d = pallas_final(enc, params["norm_g"], params["norm_b"],
                         params["proj_w"].astype(jnp.bfloat16), params["proj_b"],
                         scale_t, shift_t, B, L, D, c_out)

    dec_out = dec2d.reshape(B, L, c_out // 2, 2)
    lower = dec_out[..., 0]
    upper = dec_out[..., 1]
    return lower[:, -pred_len:, :], upper[:, -pred_len:, :]


# =====================  main  =====================

if __name__ == "__main__":
    cfg = dict(task_name="short_term_forecast",
               seq_len=8, label_len=4, pred_len=8,   # total encoder length = 16
               enc_in=2, dec_in=2, c_out=2,
               d_model=32, n_heads=4, e_layers=2, d_ff=64,
               mark_dim=4,                            # embed='timeF', freq='h'
               dropout=0.1, activation="relu",
               bucket_size=4, n_hashes=4)

    key = jax.random.PRNGKey(0)
    kp, k1, k2, k3, k4 = jax.random.split(key, 5)
    params = init_params(kp, cfg)

    B = 2
    Ldec = cfg["label_len"] + cfg["pred_len"]
    x_enc = jax.random.normal(k1, (B, cfg["seq_len"], cfg["enc_in"]), jnp.float32)
    x_mark_enc = jax.random.normal(k2, (B, cfg["seq_len"], cfg["mark_dim"]), jnp.float32)
    x_dec = jax.random.normal(k3, (B, Ldec, cfg["dec_in"]), jnp.float32)
    x_mark_dec = jax.random.normal(k4, (B, Ldec, cfg["mark_dim"]), jnp.float32)

    fwd = jax.jit(functools.partial(model_forward, params, cfg))
    lower, upper = fwd(x_enc, x_mark_enc, x_dec, x_mark_dec)
    jax.block_until_ready((lower, upper))

    assert lower.shape == (B, cfg["pred_len"], cfg["c_out"] // 2)
    assert upper.shape == (B, cfg["pred_len"], cfg["c_out"] // 2)
    assert bool(jnp.all(jnp.isfinite(lower))) and bool(jnp.all(jnp.isfinite(upper)))
    print("KERNEL_OK")
</pallas_src>

<mosaic_0001>
module attributes {stable_mosaic.version = 11 : i64} {
  func.func @_embed_kernel(%arg0: i32, %arg1: memref<16x6xf32, #tpu.memory_space<vmem>>, %arg2: memref<16x4xf32, #tpu.memory_space<vmem>>, %arg3: memref<6x32xbf16, #tpu.memory_space<vmem>>, %arg4: memref<4x32xbf16, #tpu.memory_space<vmem>>, %arg5: memref<16x32xf32, #tpu.memory_space<vmem>>, %arg6: memref<16x32xf32, #tpu.memory_space<vmem>>) attributes {dimension_semantics = [#tpu.dimension_semantics<parallel>], iteration_bounds = array<i64: 2>, scalar_prefetch = 0 : i64, scratch_operands = 0 : i64, tpu.core_type = #tpu.core_type<tc>, window_params = [{transform_indices = @transform_0, window_bounds = array<i64: 16, 6>}, {transform_indices = @transform_1, window_bounds = array<i64: 16, 4>}, {pipeline_mode = #tpu.pipeline_mode<synchronous>, transform_indices = @transform_2, window_bounds = array<i64: 6, 32>}, {pipeline_mode = #tpu.pipeline_mode<synchronous>, transform_indices = @transform_3, window_bounds = array<i64: 4, 32>}, {pipeline_mode = #tpu.pipeline_mode<synchronous>, transform_indices = @transform_4, window_bounds = array<i64: 16, 32>}, {transform_indices = @transform_5, window_bounds = array<i64: 16, 32>}]} {
    %c0 = arith.constant 0 : index
    %c0_0 = arith.constant 0 : index
    %0 = vector.load %arg1[%c0, %c0_0] : memref<16x6xf32, #tpu.memory_space<vmem>>, vector<16x6xf32>
    %1 = arith.truncf %0 : vector<16x6xf32> to vector<16x6xbf16>
    %c0_1 = arith.constant 0 : index
    %c0_2 = arith.constant 0 : index
    %2 = vector.load %arg3[%c0_1, %c0_2] : memref<6x32xbf16, #tpu.memory_space<vmem>>, vector<6x32xbf16>
    %cst = arith.constant dense<0.000000e+00> : vector<16x32xf32>
    %3 = tpu.matmul %1, %2, %cst {dimension_numbers = #tpu.dot_dimension_numbers<[1], [0], [0], [1], [0, 0, 1, 1], [], []>} : vector<16x6xbf16>, vector<6x32xbf16>, vector<16x32xf32> -> vector<16x32xf32>
    %c0_3 = arith.constant 0 : index
    %c0_4 = arith.constant 0 : index
    %4 = vector.load %arg2[%c0_3, %c0_4] : memref<16x4xf32, #tpu.memory_space<vmem>>, vector<16x4xf32>
    %5 = arith.truncf %4 : vector<16x4xf32> to vector<16x4xbf16>
    %c0_5 = arith.constant 0 : index
    %c0_6 = arith.constant 0 : index
    %6 = vector.load %arg4[%c0_5, %c0_6] : memref<4x32xbf16, #tpu.memory_space<vmem>>, vector<4x32xbf16>
    %cst_7 = arith.constant dense<0.000000e+00> : vector<16x32xf32>
    %7 = tpu.matmul %5, %6, %cst_7 {dimension_numbers = #tpu.dot_dimension_numbers<[1], [0], [0], [1], [0, 0, 1, 1], [], []>} : vector<16x4xbf16>, vector<4x32xbf16>, vector<16x32xf32> -> vector<16x32xf32>
    %8 = arith.addf %3, %7 : vector<16x32xf32>
    %c0_8 = arith.constant 0 : index
    %c0_9 = arith.constant 0 : index
    %9 = vector.load %arg5[%c0_8, %c0_9] : memref<16x32xf32, #tpu.memory_space<vmem>>, vector<16x32xf32>
    %10 = arith.addf %8, %9 : vector<16x32xf32>
    %c0_10 = arith.constant 0 : index
    %c0_11 = arith.constant 0 : index
    %11 = vector.load %arg6[%c0_10, %c0_11] : memref<16x32xf32, #tpu.memory_space<vmem>>, vector<16x32xf32>
    tpu.vector_store %arg6[%c0_10, %c0_11], %10 {strides = array<i32>} : memref<16x32xf32, #tpu.memory_space<vmem>>, vector<16x32xf32>,
    return
  }
  func.func @transform_0(%arg0: i32) -> (i32, i32) {
    %c0_i32 = arith.constant 0 : i32
    %c0_i32_0 = arith.constant 0 : i32
    return %arg0, %c0_i32 : i32, i32
  }
  func.func @transform_1(%arg0: i32) -> (i32, i32) {
    %c0_i32 = arith.constant 0 : i32
    %c0_i32_0 = arith.constant 0 : i32
    return %arg0, %c0_i32 : i32, i32
  }
  func.func @transform_2(%arg0: i32) -> (i32, i32) {
    %c0_i32 = arith.constant 0 : i32
    %c0_i32_0 = arith.constant 0 : i32
    %c0_i32_1 = arith.constant 0 : i32
    return %c0_i32, %c0_i32_0 : i32, i32
  }
  func.func @transform_3(%arg0: i32) -> (i32, i32) {
    %c0_i32 = arith.constant 0 : i32
    %c0_i32_0 = arith.constant 0 : i32
    %c0_i32_1 = arith.constant 0 : i32
    return %c0_i32, %c0_i32_0 : i32, i32
  }
  func.func @transform_4(%arg0: i32) -> (i32, i32) {
    %c0_i32 = arith.constant 0 : i32
    %c0_i32_0 = arith.constant 0 : i32
    %c0_i32_1 = arith.constant 0 : i32
    return %c0_i32, %c0_i32_0 : i32, i32
  }
  func.func @transform_5(%arg0: i32) -> (i32, i32) {
    %c0_i32 = arith.constant 0 : i32
    %c0_i32_0 = arith.constant 0 : i32
    return %arg0, %c0_i32 : i32, i32
  }
}

module attributes {stable_mosaic.version = 11 : i64} {
  func.func @_final_kernel(%arg0: i32, %arg1: memref<16x32xf32, #tpu.memory_space<vmem>>, %arg2: memref<1x32xf32, #tpu.memory_space<vmem>>, %arg3: memref<1x32xf32, #tpu.memory_space<vmem>>, %arg4: memref<32x2xbf16, #tpu.memory_space<vmem>>, %arg5: memref<1x2xf32, #tpu.memory_space<vmem>>, %arg6: memref<16x2xf32, #tpu.memory_space<vmem>>, %arg7: memref<16x2xf32, #tpu.memory_space<vmem>>, %arg8: memref<16x2xf32, #tpu.memory_space<vmem>>) attributes {dimension_semantics = [#tpu.dimension_semantics<parallel>], iteration_bounds = array<i64: 2>, scalar_prefetch = 0 : i64, scratch_operands = 0 : i64, tpu.core_type = #tpu.core_type<tc>, window_params = [{transform_indices = @transform_0, window_bounds = array<i64: 16, 32>}, {pipeline_mode = #tpu.pipeline_mode<synchronous>, transform_indices = @transform_1, window_bounds = array<i64: 1, 32>}, {pipeline_mode = #tpu.pipeline_mode<synchronous>, transform_indices = @transform_2, window_bounds = array<i64: 1, 32>}, {pipeline_mode = #tpu.pipeline_mode<synchronous>, transform_indices = @transform_3, window_bounds = array<i64: 32, 2>}, {pipeline_mode = #tpu.pipeline_mode<synchronous>, transform_indices = @transform_4, window_bounds = array<i64: 1, 2>}, {transform_indices = @transform_5, window_bounds = array<i64: 16, 2>}, {transform_indices = @transform_6, window_bounds = array<i64: 16, 2>}, {transform_indices = @transform_7, window_bounds = array<i64: 16, 2>}]} {
    %c0 = arith.constant 0 : index
    %c0_0 = arith.constant 0 : index
    %0 = vector.load %arg1[%c0, %c0_0] : memref<16x32xf32, #tpu.memory_space<vmem>>, vector<16x32xf32>
    %cst = arith.constant dense<0.000000e+00> : vector<16xf32>
    %1 = vector.multi_reduction <add>, %0, %cst [1] : vector<16x32xf32> to vector<16xf32>
    %2 = vector.shape_cast %1 : vector<16xf32> to vector<16x1xf32>
    %cst_1 = arith.constant 3.200000e+01 : f32
    %3 = vector.broadcast %cst_1 : f32 to vector<16x1xf32>
    %4 = arith.divf %2, %3 : vector<16x1xf32>
    %5 = vector.broadcast %4 : vector<16x1xf32> to vector<16x32xf32>
    %6 = arith.subf %0, %5 : vector<16x32xf32>
    %7 = arith.mulf %6, %6 : vector<16x32xf32>
    %cst_2 = arith.constant dense<0.000000e+00> : vector<16xf32>
    %8 = vector.multi_reduction <add>, %7, %cst_2 [1] : vector<16x32xf32> to vector<16xf32>
    %9 = vector.shape_cast %8 : vector<16xf32> to vector<16x1xf32>
    %cst_3 = arith.constant 3.200000e+01 : f32
    %10 = vector.broadcast %cst_3 : f32 to vector<16x1xf32>
    %11 = arith.divf %9, %10 : vector<16x1xf32>
    %cst_4 = arith.constant 9.99999974E-6 : f32
    %12 = vector.broadcast %cst_4 : f32 to vector<16x1xf32>
    %13 = arith.addf %11, %12 : vector<16x1xf32>
    %14 = math.rsqrt %13 : vector<16x1xf32>
    %15 = vector.broadcast %14 : vector<16x1xf32> to vector<16x32xf32>
    %16 = arith.mulf %6, %15 : vector<16x32xf32>
    %c0_5 = arith.constant 0 : index
    %c0_6 = arith.constant 0 : index
    %17 = vector.load %arg2[%c0_5, %c0_6] : memref<1x32xf32, #tpu.memory_space<vmem>>, vector<1x32xf32>
    %18 = vector.broadcast %17 : vector<1x32xf32> to vector<16x32xf32>
    %19 = arith.mulf %16, %18 : vector<16x32xf32>
    %c0_7 = arith.constant 0 : index
    %c0_8 = arith.constant 0 : index
    %20 = vector.load %arg3[%c0_7, %c0_8] : memref<1x32xf32, #tpu.memory_space<vmem>>, vector<1x32xf32>
    %21 = vector.broadcast %20 : vector<1x32xf32> to vector<16x32xf32>
    %22 = arith.addf %19, %21 : vector<16x32xf32>
    %23 = arith.truncf %22 : vector<16x32xf32> to vector<16x32xbf16>
    %c0_9 = arith.constant 0 : index
    %c0_10 = arith.constant 0 : index
    %24 = vector.load %arg4[%c0_9, %c0_10] : memref<32x2xbf16, #tpu.memory_space<vmem>>, vector<32x2xbf16>
    %cst_11 = arith.constant dense<0.000000e+00> : vector<16x2xf32>
    %25 = tpu.matmul %23, %24, %cst_11 {dimension_numbers = #tpu.dot_dimension_numbers<[1], [0], [0], [1], [0, 0, 1, 1], [], []>} : vector<16x32xbf16>, vector<32x2xbf16>, vector<16x2xf32> -> vector<16x2xf32>
    %c0_12 = arith.constant 0 : index
    %c0_13 = arith.constant 0 : index
    %26 = vector.load %arg5[%c0_12, %c0_13] : memref<1x2xf32, #tpu.memory_space<vmem>>, vector<1x2xf32>
    %27 = vector.broadcast %26 : vector<1x2xf32> to vector<16x2xf32>
    %28 = arith.addf %25, %27 : vector<16x2xf32>
    %c0_14 = arith.constant 0 : index
    %c0_15 = arith.constant 0 : index
    %29 = vector.load %arg6[%c0_14, %c0_15] : memref<16x2xf32, #tpu.memory_space<vmem>>, vector<16x2xf32>
    %30 = arith.mulf %28, %29 : vector<16x2xf32>
    %c0_16 = arith.constant 0 : index
    %c0_17 = arith.constant 0 : index
    %31 = vector.load %arg7[%c0_16, %c0_17] : memref<16x2xf32, #tpu.memory_space<vmem>>, vector<16x2xf32>
    %32 = arith.addf %30, %31 : vector<16x2xf32>
    %c0_18 = arith.constant 0 : index
    %c0_19 = arith.constant 0 : index
    %33 = vector.load %arg8[%c0_18, %c0_19] : memref<16x2xf32, #tpu.memory_space<vmem>>, vector<16x2xf32>
    tpu.vector_store %arg8[%c0_18, %c0_19], %32 {strides = array<i32>} : memref<16x2xf32, #tpu.memory_space<vmem>>, vector<16x2xf32>,
    return
  }
  func.func @transform_0(%arg0: i32) -> (i32, i32) {
    %c0_i32 = arith.constant 0 : i32
    %c0_i32_0 = arith.constant 0 : i32
    return %arg0, %c0_i32 : i32, i32
  }
  func.func @transform_1(%arg0: i32) -> (i32, i32) {
    %c0_i32 = arith.constant 0 : i32
    %c0_i32_0 = arith.constant 0 : i32
    %c0_i32_1 = arith.constant 0 : i32
    return %c0_i32, %c0_i32_0 : i32, i32
  }
  func.func @transform_2(%arg0: i32) -> (i32, i32) {
    %c0_i32 = arith.constant 0 : i32
    %c0_i32_0 = arith.constant 0 : i32
    %c0_i32_1 = arith.constant 0 : i32
    return %c0_i32, %c0_i32_0 : i32, i32
  }
  func.func @transform_3(%arg0: i32) -> (i32, i32) {
    %c0_i32 = arith.constant 0 : i32
    %c0_i32_0 = arith.constant 0 : i32
    %c0_i32_1 = arith.constant 0 : i32
    return %c0_i32, %c0_i32_0 : i32, i32
  }
  func.func @transform_4(%arg0: i32) -> (i32, i32) {
    %c0_i32 = arith.constant 0 : i32
    %c0_i32_0 = arith.constant 0 : i32
    %c0_i32_1 = arith.constant 0 : i32
    return %c0_i32, %c0_i32_0 : i32, i32
  }
  func.func @transform_5(%arg0: i32) -> (i32, i32) {
    %c0_i32 = arith.constant 0 : i32
    %c0_i32_0 = arith.constant 0 : i32
    return %arg0, %c0_i32 : i32, i32
  }
  func.func @transform_6(%arg0: i32) -> (i32, i32) {
    %c0_i32 = arith.constant 0 : i32
    %c0_i32_0 = arith.constant 0 : i32
    return %arg0, %c0_i32 : i32, i32
  }
  func.func @transform_7(%arg0: i32) -> (i32, i32) {
    %c0_i32 = arith.constant 0 : i32
    %c0_i32_0 = arith.constant 0 : i32
    return %arg0, %c0_i32 : i32, i32
  }
}

module attributes {stable_mosaic.version = 11 : i64} {
  func.func @_encoder_layer_kernel(%arg0: i32, %arg1: memref<16x32xf32, #tpu.memory_space<vmem>>, %arg2: memref<32x64xbf16, #tpu.memory_space<vmem>>, %arg3: memref<32x32xbf16, #tpu.memory_space<vmem>>, %arg4: memref<1x32xf32, #tpu.memory_space<vmem>>, %arg5: memref<32x64xbf16, #tpu.memory_space<vmem>>, %arg6: memref<1x64xf32, #tpu.memory_space<vmem>>, %arg7: memref<64x32xbf16, #tpu.memory_space<vmem>>, %arg8: memref<1x32xf32, #tpu.memory_space<vmem>>, %arg9: memref<1x32xf32, #tpu.memory_space<vmem>>, %arg10: memref<1x32xf32, #tpu.memory_space<vmem>>, %arg11: memref<1x32xf32, #tpu.memory_space<vmem>>, %arg12: memref<1x32xf32, #tpu.memory_space<vmem>>, %arg13: memref<16x32xf32, #tpu.memory_space<vmem>>) attributes {dimension_semantics = [#tpu.dimension_semantics<parallel>], iteration_bounds = array<i64: 2>, scalar_prefetch = 0 : i64, scratch_operands = 0 : i64, tpu.core_type = #tpu.core_type<tc>, window_params = [{transform_indices = @transform_0, window_bounds = array<i64: 16, 32>}, {pipeline_mode = #tpu.pipeline_mode<synchronous>, transform_indices = @transform_1, window_bounds = array<i64: 32, 64>}, {pipeline_mode = #tpu.pipeline_mode<synchronous>, transform_indices = @transform_2, window_bounds = array<i64: 32, 32>}, {pipeline_mode = #tpu.pipeline_mode<synchronous>, transform_indices = @transform_3, window_bounds = array<i64: 1, 32>}, {pipeline_mode = #tpu.pipeline_mode<synchronous>, transform_indices = @transform_4, window_bounds = array<i64: 32, 64>}, {pipeline_mode = #tpu.pipeline_mode<synchronous>, transform_indices = @transform_5, window_bounds = array<i64: 1, 64>}, {pipeline_mode = #tpu.pipeline_mode<synchronous>, transform_indices = @transform_6, window_bounds = array<i64: 64, 32>}, {pipeline_mode = #tpu.pipeline_mode<synchronous>, transform_indices = @transform_7, window_bounds = array<i64: 1, 32>}, {pipeline_mode = #tpu.pipeline_mode<synchronous>, transform_indices = @transform_8, window_bounds = array<i64: 1, 32>}, {pipeline_mode = #tpu.pipeline_mode<synchronous>, transform_indices = @transform_9, window_bounds = array<i64: 1, 32>}, {pipeline_mode = #tpu.pipeline_mode<synchronous>, transform_indices = @transform_10, window_bounds = array<i64: 1, 32>}, {pipeline_mode = #tpu.pipeline_mode<synchronous>, transform_indices = @transform_11, window_bounds = array<i64: 1, 32>}, {transform_indices = @transform_12, window_bounds = array<i64: 16, 32>}]} {
    %c0 = arith.constant 0 : index
    %c0_0 = arith.constant 0 : index
    %0 = vector.load %arg1[%c0, %c0_0] : memref<16x32xf32, #tpu.memory_space<vmem>>, vector<16x32xf32>
    %1 = arith.truncf %0 : vector<16x32xf32> to vector<16x32xbf16>
    %c0_1 = arith.constant 0 : index
    %c0_2 = arith.constant 0 : index
    %2 = vector.load %arg2[%c0_1, %c0_2] : memref<32x64xbf16, #tpu.memory_space<vmem>>, vector<32x64xbf16>
    %cst = arith.constant dense<0.000000e+00> : vector<16x64xf32>
    %3 = tpu.matmul %1, %2, %cst {dimension_numbers = #tpu.dot_dimension_numbers<[1], [0], [0], [1], [0, 0, 1, 1], [], []>} : vector<16x32xbf16>, vector<32x64xbf16>, vector<16x64xf32> -> vector<16x64xf32>
    %4 = vector.extract_strided_slice %3 {offsets = [0, 0], sizes = [16, 32], strides = [1, 1]} : vector<16x64xf32> to vector<16x32xf32>
    %5 = vector.extract_strided_slice %3 {offsets = [0, 32], sizes = [16, 32], strides = [1, 1]} : vector<16x64xf32> to vector<16x32xf32>
    %6 = tpu.iota {dimensions = array<i32: 0>} : vector<16x16xi32>
    %7 = tpu.iota {dimensions = array<i32: 1>} : vector<16x16xi32>
    %8 = arith.cmpi eq, %6, %7 : vector<16x16xi32>
    %9 = vector.extract_strided_slice %4 {offsets = [0, 0], sizes = [16, 8], strides = [1, 1]} : vector<16x32xf32> to vector<16x8xf32>
    %10 = vector.extract_strided_slice %5 {offsets = [0, 0], sizes = [16, 8], strides = [1, 1]} : vector<16x32xf32> to vector<16x8xf32>
    %11 = arith.mulf %9, %9 : vector<16x8xf32>
    %cst_3 = arith.constant dense<0.000000e+00> : vector<16xf32>
    %12 = vector.multi_reduction <add>, %11, %cst_3 [1] : vector<16x8xf32> to vector<16xf32>
    %13 = vector.shape_cast %12 : vector<16xf32> to vector<16x1xf32>
    %cst_4 = arith.constant 1.000000e-24 : f32
    %14 = vector.broadcast %cst_4 : f32 to vector<16x1xf32>
    %15 = arith.addf %13, %14 : vector<16x1xf32>
    %16 = math.rsqrt %15 : vector<16x1xf32>
    %17 = vector.broadcast %16 : vector<16x1xf32> to vector<16x8xf32>
    %18 = arith.mulf %9, %17 : vector<16x8xf32>
    %19 = arith.truncf %9 : vector<16x8xf32> to vector<16x8xbf16>
    %20 = arith.truncf %18 : vector<16x8xf32> to vector<16x8xbf16>
    %cst_5 = arith.constant dense<0.000000e+00> : vector<16x16xf32>
    %21 = tpu.matmul %19, %20, %cst_5 {dimension_numbers = #tpu.dot_dimension_numbers<[1], [1], [0], [0], [0, 0, 1, 0], [], []>} : vector<16x8xbf16>, vector<16x8xbf16>, vector<16x16xf32> -> vector<16x16xf32>
    %cst_6 = arith.constant 0.353553385 : f32
    %22 = vector.broadcast %cst_6 : f32 to vector<16x16xf32>
    %23 = arith.mulf %21, %22 : vector<16x16xf32>
    %cst_7 = arith.constant -5.000000e+04 : f32
    %24 = vector.broadcast %cst_7 : f32 to vector<16x16xf32>
    %25 = arith.select %8, %24, %23 : vector<16x16xi1>, vector<16x16xf32>
    %cst_8 = arith.constant dense<0xFF800000> : vector<16xf32>
    %26 = vector.multi_reduction <maximumf>, %25, %cst_8 [1] : vector<16x16xf32> to vector<16xf32>
    %27 = vector.shape_cast %26 : vector<16xf32> to vector<16x1xf32>
    %28 = vector.broadcast %27 : vector<16x1xf32> to vector<16x16xf32>
    %29 = arith.subf %25, %28 : vector<16x16xf32>
    %30 = math.exp %29 : vector<16x16xf32>
    %cst_9 = arith.constant dense<0.000000e+00> : vector<16xf32>
    %31 = vector.multi_reduction <add>, %30, %cst_9 [1] : vector<16x16xf32> to vector<16xf32>
    %32 = vector.shape_cast %31 : vector<16xf32> to vector<16x1xf32>
    %33 = tpu.reciprocal %32 {approx = true} : vector<16x1xf32> -> vector<16x1xf32>
    %34 = vector.broadcast %33 : vector<16x1xf32> to vector<16x16xf32>
    %35 = arith.mulf %30, %34 : vector<16x16xf32>
    %36 = arith.truncf %35 : vector<16x16xf32> to vector<16x16xbf16>
    %37 = arith.truncf %10 : vector<16x8xf32> to vector<16x8xbf16>
    %cst_10 = arith.constant dense<0.000000e+00> : vector<16x8xf32>
    %38 = tpu.matmul %36, %37, %cst_10 {dimension_numbers = #tpu.dot_dimension_numbers<[1], [0], [0], [1], [0, 0, 1, 1], [], []>} : vector<16x16xbf16>, vector<16x8xbf16>, vector<16x8xf32> -> vector<16x8xf32>
    %39 = vector.extract_strided_slice %4 {offsets = [0, 8], sizes = [16, 8], strides = [1, 1]} : vector<16x32xf32> to vector<16x8xf32>
    %40 = vector.extract_strided_slice %5 {offsets = [0, 8], sizes = [16, 8], strides = [1, 1]} : vector<16x32xf32> to vector<16x8xf32>
    %41 = arith.mulf %39, %39 : vector<16x8xf32>
    %cst_11 = arith.constant dense<0.000000e+00> : vector<16xf32>
    %42 = vector.multi_reduction <add>, %41, %cst_11 [1] : vector<16x8xf32> to vector<16xf32>
    %43 = vector.shape_cast %42 : vector<16xf32> to vector<16x1xf32>
    %cst_12 = arith.constant 1.000000e-24 : f32
    %44 = vector.broadcast %cst_12 : f32 to vector<16x1xf32>
    %45 = arith.addf %43, %44 : vector<16x1xf32>
    %46 = math.rsqrt %45 : vector<16x1xf32>
    %47 = vector.broadcast %46 : vector<16x1xf32> to vector<16x8xf32>
    %48 = arith.mulf %39, %47 : vector<16x8xf32>
    %49 = arith.truncf %39 : vector<16x8xf32> to vector<16x8xbf16>
    %50 = arith.truncf %48 : vector<16x8xf32> to vector<16x8xbf16>
    %cst_13 = arith.constant dense<0.000000e+00> : vector<16x16xf32>
    %51 = tpu.matmul %49, %50, %cst_13 {dimension_numbers = #tpu.dot_dimension_numbers<[1], [1], [0], [0], [0, 0, 1, 0], [], []>} : vector<16x8xbf16>, vector<16x8xbf16>, vector<16x16xf32> -> vector<16x16xf32>
    %cst_14 = arith.constant 0.353553385 : f32
    %52 = vector.broadcast %cst_14 : f32 to vector<16x16xf32>
    %53 = arith.mulf %51, %52 : vector<16x16xf32>
    %cst_15 = arith.constant -5.000000e+04 : f32
    %54 = vector.broadcast %cst_15 : f32 to vector<16x16xf32>
    %55 = arith.select %8, %54, %53 : vector<16x16xi1>, vector<16x16xf32>
    %cst_16 = arith.constant dense<0xFF800000> : vector<16xf32>
    %56 = vector.multi_reduction <maximumf>, %55, %cst_16 [1] : vector<16x16xf32> to vector<16xf32>
    %57 = vector.shape_cast %56 : vector<16xf32> to vector<16x1xf32>
    %58 = vector.broadcast %57 : vector<16x1xf32> to vector<16x16xf32>
    %59 = arith.subf %55, %58 : vector<16x16xf32>
    %60 = math.exp %59 : vector<16x16xf32>
    %cst_17 = arith.constant dense<0.000000e+00> : vector<16xf32>
    %61 = vector.multi_reduction <add>, %60, %cst_17 [1] : vector<16x16xf32> to vector<16xf32>
    %62 = vector.shape_cast %61 : vector<16xf32> to vector<16x1xf32>
    %63 = tpu.reciprocal %62 {approx = true} : vector<16x1xf32> -> vector<16x1xf32>
    %64 = vector.broadcast %63 : vector<16x1xf32> to vector<16x16xf32>
    %65 = arith.mulf %60, %64 : vector<16x16xf32>
    %66 = arith.truncf %65 : vector<16x16xf32> to vector<16x16xbf16>
    %67 = arith.truncf %40 : vector<16x8xf32> to vector<16x8xbf16>
    %cst_18 = arith.constant dense<0.000000e+00> : vector<16x8xf32>
    %68 = tpu.matmul %66, %67, %cst_18 {dimension_numbers = #tpu.dot_dimension_numbers<[1], [0], [0], [1], [0, 0, 1, 1], [], []>} : vector<16x16xbf16>, vector<16x8xbf16>, vector<16x8xf32> -> vector<16x8xf32>
    %69 = vector.extract_strided_slice %4 {offsets = [0, 16], sizes = [16, 8], strides = [1, 1]} : vector<16x32xf32> to vector<16x8xf32>
    %70 = vector.extract_strided_slice %5 {offsets = [0, 16], sizes = [16, 8], strides = [1, 1]} : vector<16x32xf32> to vector<16x8xf32>
    %71 = arith.mulf %69, %69 : vector<16x8xf32>
    %cst_19 = arith.constant dense<0.000000e+00> : vector<16xf32>
    %72 = vector.multi_reduction <add>, %71, %cst_19 [1] : vector<16x8xf32> to vector<16xf32>
    %73 = vector.shape_cast %72 : vector<16xf32> to vector<16x1xf32>
    %cst_20 = arith.constant 1.000000e-24 : f32
    %74 = vector.broadcast %cst_20 : f32 to vector<16x1xf32>
    %75 = arith.addf %73, %74 : vector<16x1xf32>
    %76 = math.rsqrt %75 : vector<16x1xf32>
    %77 = vector.broadcast %76 : vector<16x1xf32> to vector<16x8xf32>
    %78 = arith.mulf %69, %77 : vector<16x8xf32>
    %79 = arith.truncf %69 : vector<16x8xf32> to vector<16x8xbf16>
    %80 = arith.truncf %78 : vector<16x8xf32> to vector<16x8xbf16>
    %cst_21 = arith.constant dense<0.000000e+00> : vector<16x16xf32>
    %81 = tpu.matmul %79, %80, %cst_21 {dimension_numbers = #tpu.dot_dimension_numbers<[1], [1], [0], [0], [0, 0, 1, 0], [], []>} : vector<16x8xbf16>, vector<16x8xbf16>, vector<16x16xf32> -> vector<16x16xf32>
    %cst_22 = arith.constant 0.353553385 : f32
    %82 = vector.broadcast %cst_22 : f32 to vector<16x16xf32>
    %83 = arith.mulf %81, %82 : vector<16x16xf32>
    %cst_23 = arith.constant -5.000000e+04 : f32
    %84 = vector.broadcast %cst_23 : f32 to vector<16x16xf32>
    %85 = arith.select %8, %84, %83 : vector<16x16xi1>, vector<16x16xf32>
    %cst_24 = arith.constant dense<0xFF800000> : vector<16xf32>
    %86 = vector.multi_reduction <maximumf>, %85, %cst_24 [1] : vector<16x16xf32> to vector<16xf32>
    %87 = vector.shape_cast %86 : vector<16xf32> to vector<16x1xf32>
    %88 = vector.broadcast %87 : vector<16x1xf32> to vector<16x16xf32>
    %89 = arith.subf %85, %88 : vector<16x16xf32>
    %90 = math.exp %89 : vector<16x16xf32>
    %cst_25 = arith.constant dense<0.000000e+00> : vector<16xf32>
    %91 = vector.multi_reduction <add>, %90, %cst_25 [1] : vector<16x16xf32> to vector<16xf32>
    %92 = vector.shape_cast %91 : vector<16xf32> to vector<16x1xf32>
    %93 = tpu.reciprocal %92 {approx = true} : vector<16x1xf32> -> vector<16x1xf32>
    %94 = vector.broadcast %93 : vector<16x1xf32> to vector<16x16xf32>
    %95 = arith.mulf %90, %94 : vector<16x16xf32>
    %96 = arith.truncf %95 : vector<16x16xf32> to vector<16x16xbf16>
    %97 = arith.truncf %70 : vector<16x8xf32> to vector<16x8xbf16>
    %cst_26 = arith.constant dense<0.000000e+00> : vector<16x8xf32>
    %98 = tpu.matmul %96, %97, %cst_26 {dimension_numbers = #tpu.dot_dimension_numbers<[1], [0], [0], [1], [0, 0, 1, 1], [], []>} : vector<16x16xbf16>, vector<16x8xbf16>, vector<16x8xf32> -> vector<16x8xf32>
    %99 = vector.extract_strided_slice %4 {offsets = [0, 24], sizes = [16, 8], strides = [1, 1]} : vector<16x32xf32> to vector<16x8xf32>
    %100 = vector.extract_strided_slice %5 {offsets = [0, 24], sizes = [16, 8], strides = [1, 1]} : vector<16x32xf32> to vector<16x8xf32>
    %101 = arith.mulf %99, %99 : vector<16x8xf32>
    %cst_27 = arith.constant dense<0.000000e+00> : vector<16xf32>
    %102 = vector.multi_reduction <add>, %101, %cst_27 [1] : vector<16x8xf32> to vector<16xf32>
    %103 = vector.shape_cast %102 : vector<16xf32> to vector<16x1xf32>
    %cst_28 = arith.constant 1.000000e-24 : f32
    %104 = vector.broadcast %cst_28 : f32 to vector<16x1xf32>
    %105 = arith.addf %103, %104 : vector<16x1xf32>
    %106 = math.rsqrt %105 : vector<16x1xf32>
    %107 = vector.broadcast %106 : vector<16x1xf32> to vector<16x8xf32>
    %108 = arith.mulf %99, %107 : vector<16x8xf32>
    %109 = arith.truncf %99 : vector<16x8xf32> to vector<16x8xbf16>
    %110 = arith.truncf %108 : vector<16x8xf32> to vector<16x8xbf16>
    %cst_29 = arith.constant dense<0.000000e+00> : vector<16x16xf32>
    %111 = tpu.matmul %109, %110, %cst_29 {dimension_numbers = #tpu.dot_dimension_numbers<[1], [1], [0], [0], [0, 0, 1, 0], [], []>} : vector<16x8xbf16>, vector<16x8xbf16>, vector<16x16xf32> -> vector<16x16xf32>
    %cst_30 = arith.constant 0.353553385 : f32
    %112 = vector.broadcast %cst_30 : f32 to vector<16x16xf32>
    %113 = arith.mulf %111, %112 : vector<16x16xf32>
    %cst_31 = arith.constant -5.000000e+04 : f32
    %114 = vector.broadcast %cst_31 : f32 to vector<16x16xf32>
    %115 = arith.select %8, %114, %113 : vector<16x16xi1>, vector<16x16xf32>
    %cst_32 = arith.constant dense<0xFF800000> : vector<16xf32>
    %116 = vector.multi_reduction <maximumf>, %115, %cst_32 [1] : vector<16x16xf32> to vector<16xf32>
    %117 = vector.shape_cast %116 : vector<16xf32> to vector<16x1xf32>
    %118 = vector.broadcast %117 : vector<16x1xf32> to vector<16x16xf32>
    %119 = arith.subf %115, %118 : vector<16x16xf32>
    %120 = math.exp %119 : vector<16x16xf32>
    %cst_33 = arith.constant dense<0.000000e+00> : vector<16xf32>
    %121 = vector.multi_reduction <add>, %120, %cst_33 [1] : vector<16x16xf32> to vector<16xf32>
    %122 = vector.shape_cast %121 : vector<16xf32> to vector<16x1xf32>
    %123 = tpu.reciprocal %122 {approx = true} : vector<16x1xf32> -> vector<16x1xf32>
    %124 = vector.broadcast %123 : vector<16x1xf32> to vector<16x16xf32>
    %125 = arith.mulf %120, %124 : vector<16x16xf32>
    %126 = arith.truncf %125 : vector<16x16xf32> to vector<16x16xbf16>
    %127 = arith.truncf %100 : vector<16x8xf32> to vector<16x8xbf16>
    %cst_34 = arith.constant dense<0.000000e+00> : vector<16x8xf32>
    %128 = tpu.matmul %126, %127, %cst_34 {dimension_numbers = #tpu.dot_dimension_numbers<[1], [0], [0], [1], [0, 0, 1, 1], [], []>} : vector<16x16xbf16>, vector<16x8xbf16>, vector<16x8xf32> -> vector<16x8xf32>
    %129 = tpu.concatenate %38, %68, %98, %128 in 1 : vector<16x8xf32>, vector<16x8xf32>, vector<16x8xf32>, vector<16x8xf32> -> vector<16x32xf32>
    %130 = arith.truncf %129 : vector<16x32xf32> to vector<16x32xbf16>
    %c0_35 = arith.constant 0 : index
    %c0_36 = arith.constant 0 : index
    %131 = vector.load %arg3[%c0_35, %c0_36] : memref<32x32xbf16, #tpu.memory_space<vmem>>, vector<32x32xbf16>
    %cst_37 = arith.constant dense<0.000000e+00> : vector<16x32xf32>
    %132 = tpu.matmul %130, %131, %cst_37 {dimension_numbers = #tpu.dot_dimension_numbers<[1], [0], [0], [1], [0, 0, 1, 1], [], []>} : vector<16x32xbf16>, vector<32x32xbf16>, vector<16x32xf32> -> vector<16x32xf32>
    %c0_38 = arith.constant 0 : index
    %c0_39 = arith.constant 0 : index
    %133 = vector.load %arg4[%c0_38, %c0_39] : memref<1x32xf32, #tpu.memory_space<vmem>>, vector<1x32xf32>
    %134 = vector.broadcast %133 : vector<1x32xf32> to vector<16x32xf32>
    %135 = arith.addf %132, %134 : vector<16x32xf32>
    %136 = arith.addf %0, %135 : vector<16x32xf32>
    %cst_40 = arith.constant dense<0.000000e+00> : vector<16xf32>
    %137 = vector.multi_reduction <add>, %136, %cst_40 [1] : vector<16x32xf32> to vector<16xf32>
    %138 = vector.shape_cast %137 : vector<16xf32> to vector<16x1xf32>
    %cst_41 = arith.constant 3.200000e+01 : f32
    %139 = vector.broadcast %cst_41 : f32 to vector<16x1xf32>
    %140 = arith.divf %138, %139 : vector<16x1xf32>
    %141 = vector.broadcast %140 : vector<16x1xf32> to vector<16x32xf32>
    %142 = arith.subf %136, %141 : vector<16x32xf32>
    %143 = arith.mulf %142, %142 : vector<16x32xf32>
    %cst_42 = arith.constant dense<0.000000e+00> : vector<16xf32>
    %144 = vector.multi_reduction <add>, %143, %cst_42 [1] : vector<16x32xf32> to vector<16xf32>
    %145 = vector.shape_cast %144 : vector<16xf32> to vector<16x1xf32>
    %cst_43 = arith.constant 3.200000e+01 : f32
    %146 = vector.broadcast %cst_43 : f32 to vector<16x1xf32>
    %147 = arith.divf %145, %146 : vector<16x1xf32>
    %cst_44 = arith.constant 9.99999974E-6 : f32
    %148 = vector.broadcast %cst_44 : f32 to vector<16x1xf32>
    %149 = arith.addf %147, %148 : vector<16x1xf32>
    %150 = math.rsqrt %149 : vector<16x1xf32>
    %151 = vector.broadcast %150 : vector<16x1xf32> to vector<16x32xf32>
    %152 = arith.mulf %142, %151 : vector<16x32xf32>
    %c0_45 = arith.constant 0 : index
    %c0_46 = arith.constant 0 : index
    %153 = vector.load %arg9[%c0_45, %c0_46] : memref<1x32xf32, #tpu.memory_space<vmem>>, vector<1x32xf32>
    %154 = vector.broadcast %153 : vector<1x32xf32> to vector<16x32xf32>
    %155 = arith.mulf %152, %154 : vector<16x32xf32>
    %c0_47 = arith.constant 0 : index
    %c0_48 = arith.constant 0 : index
    %156 = vector.load %arg10[%c0_47, %c0_48] : memref<1x32xf32, #tpu.memory_space<vmem>>, vector<1x32xf32>
    %157 = vector.broadcast %156 : vector<1x32xf32> to vector<16x32xf32>
    %158 = arith.addf %155, %157 : vector<16x32xf32>
    %159 = arith.truncf %158 : vector<16x32xf32> to vector<16x32xbf16>
    %c0_49 = arith.constant 0 : index
    %c0_50 = arith.constant 0 : index
    %160 = vector.load %arg5[%c0_49, %c0_50] : memref<32x64xbf16, #tpu.memory_space<vmem>>, vector<32x64xbf16>
    %cst_51 = arith.constant dense<0.000000e+00> : vector<16x64xf32>
    %161 = tpu.matmul %159, %160, %cst_51 {dimension_numbers = #tpu.dot_dimension_numbers<[1], [0], [0], [1], [0, 0, 1, 1], [], []>} : vector<16x32xbf16>, vector<32x64xbf16>, vector<16x64xf32> -> vector<16x64xf32>
    %c0_52 = arith.constant 0 : index
    %c0_53 = arith.constant 0 : index
    %162 = vector.load %arg6[%c0_52, %c0_53] : memref<1x64xf32, #tpu.memory_space<vmem>>, vector<1x64xf32>
    %163 = vector.broadcast %162 : vector<1x64xf32> to vector<16x64xf32>
    %164 = arith.addf %161, %163 : vector<16x64xf32>
    %cst_54 = arith.constant 0.000000e+00 : f32
    %165 = vector.broadcast %cst_54 : f32 to vector<16x64xf32>
    %166 = arith.maximumf %164, %165 : vector<16x64xf32>
    %167 = arith.truncf %166 : vector<16x64xf32> to vector<16x64xbf16>
    %c0_55 = arith.constant 0 : index
    %c0_56 = arith.constant 0 : index
    %168 = vector.load %arg7[%c0_55, %c0_56] : memref<64x32xbf16, #tpu.memory_space<vmem>>, vector<64x32xbf16>
    %cst_57 = arith.constant dense<0.000000e+00> : vector<16x32xf32>
    %169 = tpu.matmul %167, %168, %cst_57 {dimension_numbers = #tpu.dot_dimension_numbers<[1], [0], [0], [1], [0, 0, 1, 1], [], []>} : vector<16x64xbf16>, vector<64x32xbf16>, vector<16x32xf32> -> vector<16x32xf32>
    %c0_58 = arith.constant 0 : index
    %c0_59 = arith.constant 0 : index
    %170 = vector.load %arg8[%c0_58, %c0_59] : memref<1x32xf32, #tpu.memory_space<vmem>>, vector<1x32xf32>
    %171 = vector.broadcast %170 : vector<1x32xf32> to vector<16x32xf32>
    %172 = arith.addf %169, %171 : vector<16x32xf32>
    %173 = arith.addf %158, %172 : vector<16x32xf32>
    %cst_60 = arith.constant dense<0.000000e+00> : vector<16xf32>
    %174 = vector.multi_reduction <add>, %173, %cst_60 [1] : vector<16x32xf32> to vector<16xf32>
    %175 = vector.shape_cast %174 : vector<16xf32> to vector<16x1xf32>
    %cst_61 = arith.constant 3.200000e+01 : f32
    %176 = vector.broadcast %cst_61 : f32 to vector<16x1xf32>
    %177 = arith.divf %175, %176 : vector<16x1xf32>
    %178 = vector.broadcast %177 : vector<16x1xf32> to vector<16x32xf32>
    %179 = arith.subf %173, %178 : vector<16x32xf32>
    %180 = arith.mulf %179, %179 : vector<16x32xf32>
    %cst_62 = arith.constant dense<0.000000e+00> : vector<16xf32>
    %181 = vector.multi_reduction <add>, %180, %cst_62 [1] : vector<16x32xf32> to vector<16xf32>
    %182 = vector.shape_cast %181 : vector<16xf32> to vector<16x1xf32>
    %cst_63 = arith.constant 3.200000e+01 : f32
    %183 = vector.broadcast %cst_63 : f32 to vector<16x1xf32>
    %184 = arith.divf %182, %183 : vector<16x1xf32>
    %cst_64 = arith.constant 9.99999974E-6 : f32
    %185 = vector.broadcast %cst_64 : f32 to vector<16x1xf32>
    %186 = arith.addf %184, %185 : vector<16x1xf32>
    %187 = math.rsqrt %186 : vector<16x1xf32>
    %188 = vector.broadcast %187 : vector<16x1xf32> to vector<16x32xf32>
    %189 = arith.mulf %179, %188 : vector<16x32xf32>
    %c0_65 = arith.constant 0 : index
    %c0_66 = arith.constant 0 : index
    %190 = vector.load %arg11[%c0_65, %c0_66] : memref<1x32xf32, #tpu.memory_space<vmem>>, vector<1x32xf32>
    %191 = vector.broadcast %190 : vector<1x32xf32> to vector<16x32xf32>
    %192 = arith.mulf %189, %191 : vector<16x32xf32>
    %c0_67 = arith.constant 0 : index
    %c0_68 = arith.constant 0 : index
    %193 = vector.load %arg12[%c0_67, %c0_68] : memref<1x32xf32, #tpu.memory_space<vmem>>, vector<1x32xf32>
    %194 = vector.broadcast %193 : vector<1x32xf32> to vector<16x32xf32>
    %195 = arith.addf %192, %194 : vector<16x32xf32>
    %c0_69 = arith.constant 0 : index
    %c0_70 = arith.constant 0 : index
    %196 = vector.load %arg13[%c0_69, %c0_70] : memref<16x32xf32, #tpu.memory_space<vmem>>, vector<16x32xf32>
    tpu.vector_store %arg13[%c0_69, %c0_70], %195 {strides = array<i32>} : memref<16x32xf32, #tpu.memory_space<vmem>>, vector<16x32xf32>,
    return
  }
  func.func @transform_0(%arg0: i32) -> (i32, i32) {
    %c0_i32 = arith.constant 0 : i32
    %c0_i32_0 = arith.constant 0 : i32
    return %arg0, %c0_i32 : i32, i32
  }
  func.func @transform_1(%arg0: i32) -> (i32, i32) {
    %c0_i32 = arith.constant 0 : i32
    %c0_i32_0 = arith.constant 0 : i32
    %c0_i32_1 = arith.constant 0 : i32
    return %c0_i32, %c0_i32_0 : i32, i32
  }
  func.func @transform_2(%arg0: i32) -> (i32, i32) {
    %c0_i32 = arith.constant 0 : i32
    %c0_i32_0 = arith.constant 0 : i32
    %c0_i32_1 = arith.constant 0 : i32
    return %c0_i32, %c0_i32_0 : i32, i32
  }
  func.func @transform_3(%arg0: i32) -> (i32, i32) {
    %c0_i32 = arith.constant 0 : i32
    %c0_i32_0 = arith.constant 0 : i32
    %c0_i32_1 = arith.constant 0 : i32
    return %c0_i32, %c0_i32_0 : i32, i32
  }
  func.func @transform_4(%arg0: i32) -> (i32, i32) {
    %c0_i32 = arith.constant 0 : i32
    %c0_i32_0 = arith.constant 0 : i32
    %c0_i32_1 = arith.constant 0 : i32
    return %c0_i32, %c0_i32_0 : i32, i32
  }
  func.func @transform_5(%arg0: i32) -> (i32, i32) {
    %c0_i32 = arith.constant 0 : i32
    %c0_i32_0 = arith.constant 0 : i32
    %c0_i32_1 = arith.constant 0 : i32
    return %c0_i32, %c0_i32_0 : i32, i32
  }
  func.func @transform_6(%arg0: i32) -> (i32, i32) {
    %c0_i32 = arith.constant 0 : i32
    %c0_i32_0 = arith.constant 0 : i32
    %c0_i32_1 = arith.constant 0 : i32
    return %c0_i32, %c0_i32_0 : i32, i32
  }
  func.func @transform_7(%arg0: i32) -> (i32, i32) {
    %c0_i32 = arith.constant 0 : i32
    %c0_i32_0 = arith.constant 0 : i32
    %c0_i32_1 = arith.constant 0 : i32
    return %c0_i32, %c0_i32_0 : i32, i32
  }
  func.func @transform_8(%arg0: i32) -> (i32, i32) {
    %c0_i32 = arith.constant 0 : i32
    %c0_i32_0 = arith.constant 0 : i32
    %c0_i32_1 = arith.constant 0 : i32
    return %c0_i32, %c0_i32_0 : i32, i32
  }
  func.func @transform_9(%arg0: i32) -> (i32, i32) {
    %c0_i32 = arith.constant 0 : i32
    %c0_i32_0 = arith.constant 0 : i32
    %c0_i32_1 = arith.constant 0 : i32
    return %c0_i32, %c0_i32_0 : i32, i32
  }
  func.func @transform_10(%arg0: i32) -> (i32, i32) {
    %c0_i32 = arith.constant 0 : i32
    %c0_i32_0 = arith.constant 0 : i32
    %c0_i32_1 = arith.constant 0 : i32
    return %c0_i32, %c0_i32_0 : i32, i32
  }
  func.func @transform_11(%arg0: i32) -> (i32, i32) {
    %c0_i32 = arith.constant 0 : i32
    %c0_i32_0 = arith.constant 0 : i32
    %c0_i32_1 = arith.constant 0 : i32
    return %c0_i32, %c0_i32_0 : i32, i32
  }
  func.func @transform_12(%arg0: i32) -> (i32, i32) {
    %c0_i32 = arith.constant 0 : i32
    %c0_i32_0 = arith.constant 0 : i32
    return %arg0, %c0_i32 : i32, i32
  }
}

</mosaic_0001>

<llo_original>
// kernel: model_forward.7
$region0: #{model_forward.7}
  #allocation0 [shape = 'u32[]', space=smem, size = 0x4, offset = 0x4, fixed_abs, tag = 'smem constant byte address 0x4 - core index']
  #allocation1 [shape = 'u32[72,128]{1,0:T(1,128)}', space=vmem, size = 0x9000, scoped, tag = 'internal scratch']
  %s0 = inlined_call_operand.vmem [shape: f32[32,32], index: 0, kind: input, shape index: {}]
  %s1 = inlined_call_operand.vmem [shape: f32[1,32], index: 1, kind: input, shape index: {}]
  %s2 = inlined_call_operand.vmem [shape: f32[1,32], index: 2, kind: input, shape index: {}]
  %s3 = inlined_call_operand.vmem [shape: bf16[32,2], index: 3, kind: input, shape index: {}]
  %s4 = inlined_call_operand.vmem [shape: f32[1,2], index: 4, kind: input, shape index: {}]
  %s5 = inlined_call_operand.vmem [shape: f32[32,2], index: 5, kind: input, shape index: {}]
  %s6 = inlined_call_operand.vmem [shape: f32[32,2], index: 6, kind: input, shape index: {}]
  %s7 = inlined_call_operand.vmem [shape: f32[32,2], index: 7, kind: output, shape index: {}]
  %s8 = sld [smem:[#allocation0]]
  $region61: #{model_forward.7} parent=0
    _
  %s10 = ssub.s32 1, %s8
  %s11 = scalar_select 0, %s10, %s8
  loop: start=0, step=1, limit=4
  $region2: #{model_forward.7} parent=0 // loop_pre_header
    _
  $region3: #{model_forward.7} parent=0 // loop_header
    %s13 = sphi 0, %s17
    %p14 = scmp.ge.s32.totalorder %s13, 4
    %s23 = sphi 0, %s25
    %s26 = sphi 0, %s23
    %s27 = sphi 0, %s26
    %s43 = sphi 0, %s27
    %s47 = sphi 0, %s47
    %s49 = sphi 0, %s47
    %s50 = sphi 0, %s49
    %s64 = sphi 0, %s50
    %s68 = sphi 0, %s68
    %s70 = sphi 0, %s68
    %s71 = sphi 0, %s70
    %s85 = sphi 0, %s71
    %s89 = sphi 0, %s89
    %s91 = sphi 0, %s89
    %s92 = sphi 0, %s91
    %s106 = sphi 0, %s92
    %s110 = sphi 0, %s110
    %s112 = sphi 0, %s110
    %s113 = sphi 0, %s112
    %s127 = sphi 0, %s113
    %s133 = sphi 0, %s135
    %s136 = sphi 0, %s133
    %s137 = sphi 0, %s136
    %s153 = sphi 0, %s137
    %s159 = sphi 0, %s161
    %s162 = sphi 0, %s159
    %s163 = sphi 0, %s162
    %s179 = sphi 0, %s163
    %s185 = sphi 0, %s187
    %s188 = sphi 0, %s185
    %s189 = sphi 0, %s188
    %s205 = sphi 0, %s189
  $region4: #{model_forward.7} parent=0 // loop_header_branch
    %16 = sbr.rel (%p14) target = $region8
  $region5: #{model_forward.7} parent=0 // loop_body
    %s18 = ssub.s32 %s13, 1
    %s19 = ssub.s32 %s13, 2
    %s20 = sadd.s32 %s13, 1
    %s21 = ssub.s32 %s13, %s20
    %p22 = scmp.eq.s32.totalorder %s21, 0
    %s24 = sadd.s32 %s23, 1
    %s25 = scalar_select %p22, %s23, %s24
    %p28 = pneg %p22
    %p29 = scmp.eq.s32.totalorder %s13, 1
    %p30 = por %p28, %p29
    %p31 = scmp.ne.s32.totalorder %s23, %s26
    %p32 = scmp.eq.s32.totalorder %s13, 0
    %p33 = por %p31, %p32
    %p34 = scmp.ne.s32.totalorder %s23, %s26
    %p35 = scmp.eq.s32.totalorder %s18, 1
    %p36 = por %p34, %p35
    %p37 = scmp.ne.s32.totalorder %s26, %s27
    %p38 = scmp.eq.s32.totalorder %s18, 0
    %p39 = por %p37, %p38
    %p40 = scmp.ne.s32.totalorder %s26, %s27
    %p41 = scmp.eq.s32.totalorder %s19, 1
    %p42 = por %p40, %p41
    %p44 = scmp.ne.s32.totalorder %s27, %s43
    %p45 = scmp.eq.s32.totalorder %s19, 0
    %p46 = por %p44, %p45
    %s48 = sadd.s32 %s47, 1
    %p51 = scmp.eq.s32.totalorder %s13, 1
    %p52 = scmp.ne.s32.totalorder %s47, %s49
    %p53 = scmp.eq.s32.totalorder %s13, 0
    %p54 = por %p52, %p53
    %p55 = scmp.ne.s32.totalorder %s47, %s49
    %p56 = scmp.eq.s32.totalorder %s18, 1
    %p57 = por %p55, %p56
    %p58 = scmp.ne.s32.totalorder %s49, %s50
    %p59 = scmp.eq.s32.totalorder %s18, 0
    %p60 = por %p58, %p59
    %p61 = scmp.ne.s32.totalorder %s49, %s50
    %p62 = scmp.eq.s32.totalorder %s19, 1
    %p63 = por %p61, %p62
    %p65 = scmp.ne.s32.totalorder %s50, %s64
    %p66 = scmp.eq.s32.totalorder %s19, 0
    %p67 = por %p65, %p66
    %s69 = sadd.s32 %s68, 1
    %p72 = scmp.eq.s32.totalorder %s13, 1
    %p73 = scmp.ne.s32.totalorder %s68, %s70
    %p74 = scmp.eq.s32.totalorder %s13, 0
    %p75 = por %p73, %p74
    %p76 = scmp.ne.s32.totalorder %s68, %s70
    %p77 = scmp.eq.s32.totalorder %s18, 1
    %p78 = por %p76, %p77
    %p79 = scmp.ne.s32.totalorder %s70, %s71
    %p80 = scmp.eq.s32.totalorder %s18, 0
    %p81 = por %p79, %p80
    %p82 = scmp.ne.s32.totalorder %s70, %s71
    %p83 = scmp.eq.s32.totalorder %s19, 1
    %p84 = por %p82, %p83
    %p86 = scmp.ne.s32.totalorder %s71, %s85
    %p87 = scmp.eq.s32.totalorder %s19, 0
    %p88 = por %p86, %p87
    %s90 = sadd.s32 %s89, 1
    %p93 = scmp.eq.s32.totalorder %s13, 1
    %p94 = scmp.ne.s32.totalorder %s89, %s91
    %p95 = scmp.eq.s32.totalorder %s13, 0
    %p96 = por %p94, %p95
    %p97 = scmp.ne.s32.totalorder %s89, %s91
    %p98 = scmp.eq.s32.totalorder %s18, 1
    %p99 = por %p97, %p98
    %p100 = scmp.ne.s32.totalorder %s91, %s92
    %p101 = scmp.eq.s32.totalorder %s18, 0
    %p102 = por %p100, %p101
    %p103 = scmp.ne.s32.totalorder %s91, %s92
    %p104 = scmp.eq.s32.totalorder %s19, 1
    %p105 = por %p103, %p104
    %p107 = scmp.ne.s32.totalorder %s92, %s106
    %p108 = scmp.eq.s32.totalorder %s19, 0
    %p109 = por %p107, %p108
    %s111 = sadd.s32 %s110, 1
    %p114 = scmp.eq.s32.totalorder %s13, 1
    %p115 = scmp.ne.s32.totalorder %s110, %s112
    %p116 = scmp.eq.s32.totalorder %s13, 0
    %p117 = por %p115, %p116
    %p118 = scmp.ne.s32.totalorder %s110, %s112
    %p119 = scmp.eq.s32.totalorder %s18, 1
    %p120 = por %p118, %p119
    %p121 = scmp.ne.s32.totalorder %s112, %s113
    %p122 = scmp.eq.s32.totalorder %s18, 0
    %p123 = por %p121, %p122
    %p124 = scmp.ne.s32.totalorder %s112, %s113
    %p125 = scmp.eq.s32.totalorder %s19, 1
    %p126 = por %p124, %p125
    %p128 = scmp.ne.s32.totalorder %s113, %s127
    %p129 = scmp.eq.s32.totalorder %s19, 0
    %p130 = por %p128, %p129
    %s131 = ssub.s32 %s13, %s20
    %p132 = scmp.eq.s32.totalorder %s131, 0
    %s134 = sadd.s32 %s133, 1
    %s135 = scalar_select %p132, %s133, %s134
    %p138 = pneg %p132
    %p139 = scmp.eq.s32.totalorder %s13, 1
    %p140 = por %p138, %p139
    %p141 = scmp.ne.s32.totalorder %s133, %s136
    %p142 = scmp.eq.s32.totalorder %s13, 0
    %p143 = por %p141, %p142
    %p144 = scmp.ne.s32.totalorder %s133, %s136
    %p145 = scmp.eq.s32.totalorder %s18, 1
    %p146 = por %p144, %p145
    %p147 = scmp.ne.s32.totalorder %s136, %s137
    %p148 = scmp.eq.s32.totalorder %s18, 0
    %p149 = por %p147, %p148
    %p150 = scmp.ne.s32.totalorder %s136, %s137
    %p151 = scmp.eq.s32.totalorder %s19, 1
    %p152 = por %p150, %p151
    %p154 = scmp.ne.s32.totalorder %s137, %s153
    %p155 = scmp.eq.s32.totalorder %s19, 0
    %p156 = por %p154, %p155
    %s157 = ssub.s32 %s13, %s20
    %p158 = scmp.eq.s32.totalorder %s157, 0
    %s160 = sadd.s32 %s159, 1
    %s161 = scalar_select %p158, %s159, %s160
    %p164 = pneg %p158
    %p165 = scmp.eq.s32.totalorder %s13, 1
    %p166 = por %p164, %p165
    %p167 = scmp.ne.s32.totalorder %s159, %s162
    %p168 = scmp.eq.s32.totalorder %s13, 0
    %p169 = por %p167, %p168
    %p170 = scmp.ne.s32.totalorder %s159, %s162
    %p171 = scmp.eq.s32.totalorder %s18, 1
    %p172 = por %p170, %p171
    %p173 = scmp.ne.s32.totalorder %s162, %s163
    %p174 = scmp.eq.s32.totalorder %s18, 0
    %p175 = por %p173, %p174
    %p176 = scmp.ne.s32.totalorder %s162, %s163
    %p177 = scmp.eq.s32.totalorder %s19, 1
    %p178 = por %p176, %p177
    %p180 = scmp.ne.s32.totalorder %s163, %s179
    %p181 = scmp.eq.s32.totalorder %s19, 0
    %p182 = por %p180, %p181
    %s183 = ssub.s32 %s13, %s20
    %p184 = scmp.eq.s32.totalorder %s183, 0
    %s186 = sadd.s32 %s185, 1
    %s187 = scalar_select %p184, %s185, %s186
    %p190 = pneg %p184
    %p191 = scmp.eq.s32.totalorder %s13, 1
    %p192 = por %p190, %p191
    %p193 = scmp.ne.s32.totalorder %s185, %s188
    %p194 = scmp.eq.s32.totalorder %s13, 0
    %p195 = por %p193, %p194
    %p196 = scmp.ne.s32.totalorder %s185, %s188
    %p197 = scmp.eq.s32.totalorder %s18, 1
    %p198 = por %p196, %p197
    %p199 = scmp.ne.s32.totalorder %s188, %s189
    %p200 = scmp.eq.s32.totalorder %s18, 0
    %p201 = por %p199, %p200
    %p202 = scmp.ne.s32.totalorder %s188, %s189
    %p203 = scmp.eq.s32.totalorder %s19, 1
    %p204 = por %p202, %p203
    %p206 = scmp.ne.s32.totalorder %s189, %s205
    %p207 = scmp.eq.s32.totalorder %s19, 0
    %p208 = por %p206, %p207
    %p209 = scmp.le.s32.totalorder 1, %s13
    %p210 = scmp.lt.s32.totalorder %s13, 3
    %p211 = pnand %p209, %p210
    %p212 = pneg %p211
    // Predicated region
    $region9: #{model_forward.7} parent=5 // pred_check
      _
    $region10: #{model_forward.7} parent=5 // pred_check_branch
      %214 = sbr.rel (%p211) target = $region12
    $region11: #{model_forward.7} parent=5 // pred_region
      %s215 = ssub.s32 %s13, 1
      // Predicated region
      $region13: #{model_forward.7} parent=11 // pred_check
        %p216 = pneg %p60
      $region14: #{model_forward.7} parent=11 // pred_check_branch
        %218 = sbr.rel (%p216) target = $region16
      $region15: #{model_forward.7} parent=11 // pred_region
        _
      $region16: #{model_forward.7} parent=11 // pred_fallthru
        _
      // Predicated region
      $region17: #{model_forward.7} parent=11 // pred_check
        %p219 = pneg %p81
      $region18: #{model_forward.7} parent=11 // pred_check_branch
        %221 = sbr.rel (%p219) target = $region20
      $region19: #{model_forward.7} parent=11 // pred_region
        _
      $region20: #{model_forward.7} parent=11 // pred_fallthru
        _
      // Predicated region
      $region21: #{model_forward.7} parent=11 // pred_check
        %p222 = pneg %p102
      $region22: #{model_forward.7} parent=11 // pred_check_branch
        %224 = sbr.rel (%p222) target = $region24
      $region23: #{model_forward.7} parent=11 // pred_region
        _
      $region24: #{model_forward.7} parent=11 // pred_fallthru
        _
      // Predicated region
      $region25: #{model_forward.7} parent=11 // pred_check
        %p225 = pneg %p123
      $region26: #{model_forward.7} parent=11 // pred_check_branch
        %227 = sbr.rel (%p225) target = $region28
      $region27: #{model_forward.7} parent=11 // pred_region
        _
      $region28: #{model_forward.7} parent=11 // pred_fallthru
        _
    $region12: #{model_forward.7} parent=5 // pred_fallthru
      _
    %p228 = scmp.lt.s32.totalorder %s13, 2
    // Predicated region
    $region29: #{model_forward.7} parent=5 // pred_check
      %p229 = pneg %p228
    $region30: #{model_forward.7} parent=5 // pred_check_branch
      %231 = sbr.rel (%p229) target = $region32
    $region31: #{model_forward.7} parent=5 // pred_region
      // Predicated region
      $region33: #{model_forward.7} parent=31 // pred_check
        %p232 = pneg %p33
      $region34: #{model_forward.7} parent=31 // pred_check_branch
        %234 = sbr.rel (%p232) target = $region36
      $region35: #{model_forward.7} parent=31 // pred_region
        %s235 = smul.u32 2, %s13
        %p236 = scmp.lt.s32.totalorder %s235, 3
        %s237 = scalar_select %p236, %s235, 3
        %s238 = smul.addr %s237, 8
        %s239 = scalar_lea.vmem %s0, %s238
        %s240 = smul.u32 2, %s13
      $region36: #{model_forward.7} parent=31 // pred_fallthru
        _
      // Predicated region
      $region37: #{model_forward.7} parent=31 // pred_check
        %p241 = pneg %p143
      $region38: #{model_forward.7} parent=31 // pred_check_branch
        %243 = sbr.rel (%p241) target = $region40
      $region39: #{model_forward.7} parent=31 // pred_region
        %s244 = smul.u32 2, %s13
        %p245 = scmp.lt.s32.totalorder %s244, 3
        %s246 = scalar_select %p245, %s244, 3
        %s247 = smul.addr %s246, 8
        %s248 = scalar_lea.vmem %s5, %s247
        %s249 = smul.u32 2, %s13
      $region40: #{model_forward.7} parent=31 // pred_fallthru
        _
      // Predicated region
      $region41: #{model_forward.7} parent=31 // pred_check
        %p250 = pneg %p169
      $region42: #{model_forward.7} parent=31 // pred_check_branch
        %252 = sbr.rel (%p250) target = $region44
      $region43: #{model_forward.7} parent=31 // pred_region
        %s253 = smul.u32 2, %s13
        %p254 = scmp.lt.s32.totalorder %s253, 3
        %s255 = scalar_select %p254, %s253, 3
        %s256 = smul.addr %s255, 8
        %s257 = scalar_lea.vmem %s6, %s256
        %s258 = smul.u32 2, %s13
      $region44: #{model_forward.7} parent=31 // pred_fallthru
        _
    $region32: #{model_forward.7} parent=5 // pred_fallthru
      _
    %p259 = scmp.le.s32.totalorder 1, %s13
    %p260 = scmp.lt.s32.totalorder %s13, 3
    %p261 = pnand %p259, %p260
    %p262 = pneg %p261
    // Predicated region
    $region45: #{model_forward.7} parent=5 // pred_check
      _
    $region46: #{model_forward.7} parent=5 // pred_check_branch
      %264 = sbr.rel (%p261) target = $region48
    $region47: #{model_forward.7} parent=5 // pred_region
      %s265 = ssub.s32 %s13, 1
      %s266 = smul.u32 2, %s18
      %p267 = scmp.lt.s32.totalorder %s266, 3
      %s268 = scalar_select %p267, %s266, 3
      %s269 = smul.addr %s268, 8
      %s270 = scalar_lea.vmem %s0, %s269
      %p271 = pneg %p39
      %p272 = pneg %p36
      %p273 = pneg %p60
      %p274 = pneg %p57
      %p275 = pneg %p81
      %p276 = pneg %p78
      %p277 = pneg %p102
      %p278 = pneg %p99
      %p279 = pneg %p123
      %p280 = pneg %p120
      %s281 = smul.u32 2, %s18
      %p282 = scmp.lt.s32.totalorder %s281, 3
      %s283 = scalar_select %p282, %s281, 3
      %s284 = smul.addr %s283, 8
      %s285 = scalar_lea.vmem %s5, %s284
      %p286 = pneg %p149
      %p287 = pneg %p146
      %s288 = smul.u32 2, %s18
      %p289 = scmp.lt.s32.totalorder %s288, 3
      %s290 = scalar_select %p289, %s288, 3
      %s291 = smul.addr %s290, 8
      %s292 = scalar_lea.vmem %s6, %s291
      %p293 = pneg %p175
      %p294 = pneg %p172
      %p295 = pneg %p201
      %p296 = pneg %p198
      %s297 = smul.u32 2, %s18
      %p298 = scmp.lt.s32.totalorder %s297, 3
      %s299 = scalar_select %p298, %s297, 3
      %s300 = smul.addr %s299, 8
      %s301 = scalar_lea.vmem %s7, %s300
      %s302 = smul.u32 2, %s18
      %p303 = scmp.lt.s32.totalorder %s302, 3
      %s304 = scalar_select %p303, %s302, 3
      %s305 = smul.addr %s304, 8
      %s306 = scalar_lea.vmem %s0, %s305
      %s307 = smul.u32 2, %s18
      %s308 = smul.u32 2, %s18
      %p309 = scmp.lt.s32.totalorder %s308, 3
      %s310 = scalar_select %p309, %s308, 3
      %s311 = smul.addr %s310, 8
      %s312 = scalar_lea.vmem %s5, %s311
      %s313 = smul.u32 2, %s18
      %s314 = smul.u32 2, %s18
      %p315 = scmp.lt.s32.totalorder %s314, 3
      %s316 = scalar_select %p315, %s314, 3
      %s317 = smul.addr %s316, 8
      %s318 = scalar_lea.vmem %s6, %s317
      %s319 = smul.u32 2, %s18
      %s320 = smul.u32 2, %s18
      %p321 = scmp.lt.s32.totalorder %s320, 3
      %s322 = scalar_select %p321, %s320, 3
      %s323 = smul.addr %s322, 8
      %s324 = scalar_lea.vmem %s7, %s323
      %s325 = smul.u32 2, %s18
      %v327 = vld [vmem:[%s306] sm:$0xff]
      %v328 = vld [vmem:[%s306 + $0x8] sm:$0xff]
      %vm329 = vcmask 261120
      %v330 = vsel %vm329, %v327, 0.0
      %331 = vadd.xlane.f32.xlu0 %v330
      %v332 = vpop.xlane.xlu0 %331
      %v333 = vsel %vm329, %v328, 0.0
      %334 = vadd.xlane.f32.xlu0 %v333
      %v335 = vpop.xlane.xlu0 %334
      %v336 = vrcp.pop 32.0
      %v337 = vmul.f32 32.0, %v336
      %v338 = vsub.f32 1.0, %v337
      %v339 = vmul.f32 %v336, %v338
      %v340 = vadd.f32 %v336, %v339
      %vm341 = vweird.f32 %v336
      %v342 = vsel %vm341, %v336, %v340
      %v343 = vmul.f32 %v332, %v342
      %v344 = vmul.f32 %v335, %v342
      %v345 = vsub.f32 %v327, %v343
      %v346 = vsub.f32 %v328, %v344
      %v347 = vmul.f32 %v345, %v345
      %v348 = vmul.f32 %v346, %v346
      %v349 = vsel %vm329, %v347, 0.0
      %350 = vadd.xlane.f32.xlu0 %v349
      %v351 = vpop.xlane.xlu0 %350
      %v352 = vsel %vm329, %v348, 0.0
      %353 = vadd.xlane.f32.xlu0 %v352
      %v354 = vpop.xlane.xlu0 %353
      %v355 = vmul.f32 %v351, %v342
      %v356 = vmul.f32 %v354, %v342
      %v357 = vadd.f32 %v355, 1e-05
      %v358 = vadd.f32 %v356, 1e-05
      %v359 = vrsqrt.pop %v357
      %v360 = vmul.f32 %v359, %v357
      %v361 = vmul.f32 %v360, %v359
      %v362 = vmul.f32 0.5, %v361
      %v363 = vsub.f32 1.5, %v362
      %v364 = vmul.f32 %v359, %v363
      %vm365 = vweird.f32 %v357
      %vm366 = vweird.f32 %v359
      %vm367 = vmor %vm365, %vm366
      %v368 = vsel %vm367, %v359, %v364
      %v369 = vrsqrt.pop %v358
      %v370 = vmul.f32 %v369, %v358
      %v371 = vmul.f32 %v370, %v369
      %v372 = vmul.f32 0.5, %v371
      %v373 = vsub.f32 1.5, %v372
      %v374 = vmul.f32 %v369, %v373
      %vm375 = vweird.f32 %v358
      %vm376 = vweird.f32 %v369
      %vm377 = vmor %vm375, %vm376
      %v378 = vsel %vm377, %v369, %v374
      %v379 = vmul.f32 %v345, %v368
      %v380 = vmul.f32 %v346, %v378
      %v381 = vld [vmem:[%s1] sm:$0x1]
      %v383 = vperm.slane %v381, 0
      %v385 = vmul.f32 %v379, %v383
      %v386 = vmul.f32 %v380, %v383
      %v387 = vld [vmem:[%s2] sm:$0x1]
      %v389 = vperm.slane %v387, 0
      %v391 = vadd.f32 %v385, %v389
      %v392 = vadd.f32 %v386, %v389
      %v393 = vpack.c.bf16 %v392, %v391
      %v394 = vld [vmem:[%s3] sm:$0xf]
      %v395 = vld [vmem:[%s3 + $0x4] sm:$0xf]
      %v396 = vld [vmem:[%s3 + $0x8] sm:$0xf]
      %v397 = vld [vmem:[%s3 + $0xc] sm:$0xf]
      %v398 = vld [vmem:[%s4] sm:$0x1]
      %v400 = vperm.slane %v398, 0
      %v406 = vunpack.c.l.b16 %v394
      %v407 = vunpack.c.l.b16 %v395
      %v408 = vunpack.c.l.b16 %v396
      %v409 = vunpack.c.l.b16 %v397
      %v410 = vpack.c.b16 %v407, %v406
      %v411 = vpack.c.b16 %v409, %v408
      %v415 = vsel %vm329, %v393, 0
      %417 = vmatpush.bf16.msra.mxu0 0
      %418 = vmatpush.bf16.msra.mxu0 0
      %419 = vmatpush.bf16.msra.mxu0 0
      %420 = vmatpush.bf16.msra.mxu0 0
      %421 = vmatpush.bf16.msra.mxu0 0
      %422 = vmatpush.bf16.msra.mxu0 0
      %423 = vmatpush.bf16.msra.mxu0 %v411
      %424 = vmatpush.bf16.msra.mxu0 %v410
      %425 = vmatmul.bf16.gmra.mxu0 %v415
      %v426 = vpop.f32.mrf.mxu0
      %v427 = vadd.f32 %v400, %v426
      %v428 = vpop.f32.mrf.mxu0
      %v429 = vadd.f32 %v400, %v428
      %430 = vdwg.mxu0
      %v431 = vld [vmem:[%s312] sm:$0xff]
      %v432 = vld [vmem:[%s312 + $0x8] sm:$0xff]
      %v433 = vmul.f32 %v427, %v431
      %v434 = vmul.f32 %v429, %v432
      %v435 = vld [vmem:[%s318] sm:$0xff]
      %v436 = vld [vmem:[%s318 + $0x8] sm:$0xff]
      %v437 = vadd.f32 %v433, %v435
      %v438 = vadd.f32 %v434, %v436
      %vm439 = vcmask 15360
      %440 = vst.msk [vmem:[%s324] sm:$0xff] %vm439, %v437
      %441 = vst.msk [vmem:[%s324 + $0x8] sm:$0xff] %vm439, %v438
      %s442 = smul.u32 2, %s18
      %p443 = scmp.lt.s32.totalorder %s442, 3
      %s444 = scalar_select %p443, %s442, 3
      %s445 = smul.addr %s444, 8
      %s446 = scalar_lea.vmem %s7, %s445
      // Predicated region
      $region49: #{model_forward.7} parent=47 // pred_check
        %p447 = pneg %p198
      $region50: #{model_forward.7} parent=47 // pred_check_branch
        %449 = sbr.rel (%p447) target = $region52
      $region51: #{model_forward.7} parent=47 // pred_region
        %s450 = smul.u32 2, %s18
      $region52: #{model_forward.7} parent=47 // pred_fallthru
        _
    $region48: #{model_forward.7} parent=5 // pred_fallthru
      _
    %p451 = scmp.le.s32.totalorder 2, %s13
    // Predicated region
    $region53: #{model_forward.7} parent=5 // pred_check
      %p452 = pneg %p451
    $region54: #{model_forward.7} parent=5 // pred_check_branch
      %454 = sbr.rel (%p452) target = $region56
    $region55: #{model_forward.7} parent=5 // pred_region
      %s455 = ssub.s32 %s13, 2
      // Predicated region
      $region57: #{model_forward.7} parent=55 // pred_check
        %p456 = pneg %p204
      $region58: #{model_forward.7} parent=55 // pred_check_branch
        %458 = sbr.rel (%p456) target = $region60
      $region59: #{model_forward.7} parent=55 // pred_region
        %s459 = smul.u32 2, %s19
        %p460 = scmp.lt.s32.totalorder %s459, 3
        %s461 = scalar_select %p460, %s459, 3
        %s462 = smul.addr %s461, 8
        %s463 = scalar_lea.vmem %s7, %s462
      $region60: #{model_forward.7} parent=55 // pred_fallthru
        _
    $region56: #{model_forward.7} parent=5 // pred_fallthru
      _
  $region6: #{model_forward.7} parent=0 // loop_footer
    %s17 = sadd.s32 1, %s13
  $region7: #{model_forward.7} parent=0 // loop_footer_branch
    %12 = sbr.rel target = $region3
  $region8: #{model_forward.7} parent=0 // loop_exit
    _

// kernel: model_forward.4
$region0: #{model_forward.4}
  #allocation0 [shape = 'u32[]', space=smem, size = 0x4, offset = 0x4, fixed_abs, tag = 'smem constant byte address 0x4 - core index']
  #allocation1 [shape = 'u32[72,128]{1,0:T(1,128)}', space=vmem, size = 0x9000, scoped, tag = 'internal scratch']
  %s0 = inlined_call_operand.vmem [shape: f32[32,6], index: 0, kind: input, shape index: {}]
  %s1 = inlined_call_operand.vmem [shape: f32[32,4], index: 1, kind: input, shape index: {}]
  %s2 = inlined_call_operand.vmem [shape: bf16[6,32], index: 2, kind: input, shape index: {}]
  %s3 = inlined_call_operand.vmem [shape: bf16[4,32], index: 3, kind: input, shape index: {}]
  %s4 = inlined_call_operand.vmem [shape: f32[16,32], index: 4, kind: input, shape index: {}]
  %s5 = inlined_call_operand.vmem [shape: f32[32,32], index: 5, kind: output, shape index: {}]
  %s6 = sld [smem:[#allocation0]]
  $region53: #{model_forward.4} parent=0
    _
  %s8 = ssub.s32 1, %s6
  %s9 = scalar_select 0, %s8, %s6
  loop: start=0, step=1, limit=4
  $region2: #{model_forward.4} parent=0 // loop_pre_header
    _
  $region3: #{model_forward.4} parent=0 // loop_header
    %s11 = sphi 0, %s15
    %p12 = scmp.ge.s32.totalorder %s11, 4
    %s21 = sphi 0, %s23
    %s24 = sphi 0, %s21
    %s25 = sphi 0, %s24
    %s41 = sphi 0, %s25
    %s47 = sphi 0, %s49
    %s50 = sphi 0, %s47
    %s51 = sphi 0, %s50
    %s67 = sphi 0, %s51
    %s71 = sphi 0, %s71
    %s73 = sphi 0, %s71
    %s74 = sphi 0, %s73
    %s88 = sphi 0, %s74
    %s92 = sphi 0, %s92
    %s94 = sphi 0, %s92
    %s95 = sphi 0, %s94
    %s109 = sphi 0, %s95
    %s113 = sphi 0, %s113
    %s115 = sphi 0, %s113
    %s116 = sphi 0, %s115
    %s130 = sphi 0, %s116
    %s136 = sphi 0, %s138
    %s139 = sphi 0, %s136
    %s140 = sphi 0, %s139
    %s156 = sphi 0, %s140
  $region4: #{model_forward.4} parent=0 // loop_header_branch
    %14 = sbr.rel (%p12) target = $region8
  $region5: #{model_forward.4} parent=0 // loop_body
    %s16 = ssub.s32 %s11, 1
    %s17 = ssub.s32 %s11, 2
    %s18 = sadd.s32 %s11, 1
    %s19 = ssub.s32 %s11, %s18
    %p20 = scmp.eq.s32.totalorder %s19, 0
    %s22 = sadd.s32 %s21, 1
    %s23 = scalar_select %p20, %s21, %s22
    %p26 = pneg %p20
    %p27 = scmp.eq.s32.totalorder %s11, 1
    %p28 = por %p26, %p27
    %p29 = scmp.ne.s32.totalorder %s21, %s24
    %p30 = scmp.eq.s32.totalorder %s11, 0
    %p31 = por %p29, %p30
    %p32 = scmp.ne.s32.totalorder %s21, %s24
    %p33 = scmp.eq.s32.totalorder %s16, 1
    %p34 = por %p32, %p33
    %p35 = scmp.ne.s32.totalorder %s24, %s25
    %p36 = scmp.eq.s32.totalorder %s16, 0
    %p37 = por %p35, %p36
    %p38 = scmp.ne.s32.totalorder %s24, %s25
    %p39 = scmp.eq.s32.totalorder %s17, 1
    %p40 = por %p38, %p39
    %p42 = scmp.ne.s32.totalorder %s25, %s41
    %p43 = scmp.eq.s32.totalorder %s17, 0
    %p44 = por %p42, %p43
    %s45 = ssub.s32 %s11, %s18
    %p46 = scmp.eq.s32.totalorder %s45, 0
    %s48 = sadd.s32 %s47, 1
    %s49 = scalar_select %p46, %s47, %s48
    %p52 = pneg %p46
    %p53 = scmp.eq.s32.totalorder %s11, 1
    %p54 = por %p52, %p53
    %p55 = scmp.ne.s32.totalorder %s47, %s50
    %p56 = scmp.eq.s32.totalorder %s11, 0
    %p57 = por %p55, %p56
    %p58 = scmp.ne.s32.totalorder %s47, %s50
    %p59 = scmp.eq.s32.totalorder %s16, 1
    %p60 = por %p58, %p59
    %p61 = scmp.ne.s32.totalorder %s50, %s51
    %p62 = scmp.eq.s32.totalorder %s16, 0
    %p63 = por %p61, %p62
    %p64 = scmp.ne.s32.totalorder %s50, %s51
    %p65 = scmp.eq.s32.totalorder %s17, 1
    %p66 = por %p64, %p65
    %p68 = scmp.ne.s32.totalorder %s51, %s67
    %p69 = scmp.eq.s32.totalorder %s17, 0
    %p70 = por %p68, %p69
    %s72 = sadd.s32 %s71, 1
    %p75 = scmp.eq.s32.totalorder %s11, 1
    %p76 = scmp.ne.s32.totalorder %s71, %s73
    %p77 = scmp.eq.s32.totalorder %s11, 0
    %p78 = por %p76, %p77
    %p79 = scmp.ne.s32.totalorder %s71, %s73
    %p80 = scmp.eq.s32.totalorder %s16, 1
    %p81 = por %p79, %p80
    %p82 = scmp.ne.s32.totalorder %s73, %s74
    %p83 = scmp.eq.s32.totalorder %s16, 0
    %p84 = por %p82, %p83
    %p85 = scmp.ne.s32.totalorder %s73, %s74
    %p86 = scmp.eq.s32.totalorder %s17, 1
    %p87 = por %p85, %p86
    %p89 = scmp.ne.s32.totalorder %s74, %s88
    %p90 = scmp.eq.s32.totalorder %s17, 0
    %p91 = por %p89, %p90
    %s93 = sadd.s32 %s92, 1
    %p96 = scmp.eq.s32.totalorder %s11, 1
    %p97 = scmp.ne.s32.totalorder %s92, %s94
    %p98 = scmp.eq.s32.totalorder %s11, 0
    %p99 = por %p97, %p98
    %p100 = scmp.ne.s32.totalorder %s92, %s94
    %p101 = scmp.eq.s32.totalorder %s16, 1
    %p102 = por %p100, %p101
    %p103 = scmp.ne.s32.totalorder %s94, %s95
    %p104 = scmp.eq.s32.totalorder %s16, 0
    %p105 = por %p103, %p104
    %p106 = scmp.ne.s32.totalorder %s94, %s95
    %p107 = scmp.eq.s32.totalorder %s17, 1
    %p108 = por %p106, %p107
    %p110 = scmp.ne.s32.totalorder %s95, %s109
    %p111 = scmp.eq.s32.totalorder %s17, 0
    %p112 = por %p110, %p111
    %s114 = sadd.s32 %s113, 1
    %p117 = scmp.eq.s32.totalorder %s11, 1
    %p118 = scmp.ne.s32.totalorder %s113, %s115
    %p119 = scmp.eq.s32.totalorder %s11, 0
    %p120 = por %p118, %p119
    %p121 = scmp.ne.s32.totalorder %s113, %s115
    %p122 = scmp.eq.s32.totalorder %s16, 1
    %p123 = por %p121, %p122
    %p124 = scmp.ne.s32.totalorder %s115, %s116
    %p125 = scmp.eq.s32.totalorder %s16, 0
    %p126 = por %p124, %p125
    %p127 = scmp.ne.s32.totalorder %s115, %s116
    %p128 = scmp.eq.s32.totalorder %s17, 1
    %p129 = por %p127, %p128
    %p131 = scmp.ne.s32.totalorder %s116, %s130
    %p132 = scmp.eq.s32.totalorder %s17, 0
    %p133 = por %p131, %p132
    %s134 = ssub.s32 %s11, %s18
    %p135 = scmp.eq.s32.totalorder %s134, 0
    %s137 = sadd.s32 %s136, 1
    %s138 = scalar_select %p135, %s136, %s137
    %p141 = pneg %p135
    %p142 = scmp.eq.s32.totalorder %s11, 1
    %p143 = por %p141, %p142
    %p144 = scmp.ne.s32.totalorder %s136, %s139
    %p145 = scmp.eq.s32.totalorder %s11, 0
    %p146 = por %p144, %p145
    %p147 = scmp.ne.s32.totalorder %s136, %s139
    %p148 = scmp.eq.s32.totalorder %s16, 1
    %p149 = por %p147, %p148
    %p150 = scmp.ne.s32.totalorder %s139, %s140
    %p151 = scmp.eq.s32.totalorder %s16, 0
    %p152 = por %p150, %p151
    %p153 = scmp.ne.s32.totalorder %s139, %s140
    %p154 = scmp.eq.s32.totalorder %s17, 1
    %p155 = por %p153, %p154
    %p157 = scmp.ne.s32.totalorder %s140, %s156
    %p158 = scmp.eq.s32.totalorder %s17, 0
    %p159 = por %p157, %p158
    %p160 = scmp.le.s32.totalorder 1, %s11
    %p161 = scmp.lt.s32.totalorder %s11, 3
    %p162 = pnand %p160, %p161
    %p163 = pneg %p162
    // Predicated region
    $region9: #{model_forward.4} parent=5 // pred_check
      _
    $region10: #{model_forward.4} parent=5 // pred_check_branch
      %165 = sbr.rel (%p162) target = $region12
    $region11: #{model_forward.4} parent=5 // pred_region
      %s166 = ssub.s32 %s11, 1
      // Predicated region
      $region13: #{model_forward.4} parent=11 // pred_check
        %p167 = pneg %p84
      $region14: #{model_forward.4} parent=11 // pred_check_branch
        %169 = sbr.rel (%p167) target = $region16
      $region15: #{model_forward.4} parent=11 // pred_region
        _
      $region16: #{model_forward.4} parent=11 // pred_fallthru
        _
      // Predicated region
      $region17: #{model_forward.4} parent=11 // pred_check
        %p170 = pneg %p105
      $region18: #{model_forward.4} parent=11 // pred_check_branch
        %172 = sbr.rel (%p170) target = $region20
      $region19: #{model_forward.4} parent=11 // pred_region
        _
      $region20: #{model_forward.4} parent=11 // pred_fallthru
        _
      // Predicated region
      $region21: #{model_forward.4} parent=11 // pred_check
        %p173 = pneg %p126
      $region22: #{model_forward.4} parent=11 // pred_check_branch
        %175 = sbr.rel (%p173) target = $region24
      $region23: #{model_forward.4} parent=11 // pred_region
        _
      $region24: #{model_forward.4} parent=11 // pred_fallthru
        _
    $region12: #{model_forward.4} parent=5 // pred_fallthru
      _
    %p176 = scmp.lt.s32.totalorder %s11, 2
    // Predicated region
    $region25: #{model_forward.4} parent=5 // pred_check
      %p177 = pneg %p176
    $region26: #{model_forward.4} parent=5 // pred_check_branch
      %179 = sbr.rel (%p177) target = $region28
    $region27: #{model_forward.4} parent=5 // pred_region
      // Predicated region
      $region29: #{model_forward.4} parent=27 // pred_check
        %p180 = pneg %p31
      $region30: #{model_forward.4} parent=27 // pred_check_branch
        %182 = sbr.rel (%p180) target = $region32
      $region31: #{model_forward.4} parent=27 // pred_region
        %s183 = smul.u32 2, %s11
        %p184 = scmp.lt.s32.totalorder %s183, 3
        %s185 = scalar_select %p184, %s183, 3
        %s186 = smul.addr %s185, 8
        %s187 = scalar_lea.vmem %s0, %s186
        %s188 = smul.u32 2, %s11
      $region32: #{model_forward.4} parent=27 // pred_fallthru
        _
      // Predicated region
      $region33: #{model_forward.4} parent=27 // pred_check
        %p189 = pneg %p57
      $region34: #{model_forward.4} parent=27 // pred_check_branch
        %191 = sbr.rel (%p189) target = $region36
      $region35: #{model_forward.4} parent=27 // pred_region
        %s192 = smul.u32 2, %s11
        %p193 = scmp.lt.s32.totalorder %s192, 3
        %s194 = scalar_select %p193, %s192, 3
        %s195 = smul.addr %s194, 8
        %s196 = scalar_lea.vmem %s1, %s195
        %s197 = smul.u32 2, %s11
      $region36: #{model_forward.4} parent=27 // pred_fallthru
        _
    $region28: #{model_forward.4} parent=5 // pred_fallthru
      _
    %p198 = scmp.le.s32.totalorder 1, %s11
    %p199 = scmp.lt.s32.totalorder %s11, 3
    %p200 = pnand %p198, %p199
    %p201 = pneg %p200
    // Predicated region
    $region37: #{model_forward.4} parent=5 // pred_check
      _
    $region38: #{model_forward.4} parent=5 // pred_check_branch
      %203 = sbr.rel (%p200) target = $region40
    $region39: #{model_forward.4} parent=5 // pred_region
      %s204 = ssub.s32 %s11, 1
      %s205 = smul.u32 2, %s16
      %p206 = scmp.lt.s32.totalorder %s205, 3
      %s207 = scalar_select %p206, %s205, 3
      %s208 = smul.addr %s207, 8
      %s209 = scalar_lea.vmem %s0, %s208
      %p210 = pneg %p37
      %p211 = pneg %p34
      %s212 = smul.u32 2, %s16
      %p213 = scmp.lt.s32.totalorder %s212, 3
      %s214 = scalar_select %p213, %s212, 3
      %s215 = smul.addr %s214, 8
      %s216 = scalar_lea.vmem %s1, %s215
      %p217 = pneg %p63
      %p218 = pneg %p60
      %p219 = pneg %p84
      %p220 = pneg %p81
      %p221 = pneg %p105
      %p222 = pneg %p102
      %p223 = pneg %p126
      %p224 = pneg %p123
      %p225 = pneg %p152
      %p226 = pneg %p149
      %s227 = smul.u32 2, %s16
      %p228 = scmp.lt.s32.totalorder %s227, 3
      %s229 = scalar_select %p228, %s227, 3
      %s230 = smul.addr %s229, 8
      %s231 = scalar_lea.vmem %s5, %s230
      %s232 = smul.u32 2, %s16
      %p233 = scmp.lt.s32.totalorder %s232, 3
      %s234 = scalar_select %p233, %s232, 3
      %s235 = smul.addr %s234, 8
      %s236 = scalar_lea.vmem %s0, %s235
      %s237 = smul.u32 2, %s16
      %s238 = smul.u32 2, %s16
      %p239 = scmp.lt.s32.totalorder %s238, 3
      %s240 = scalar_select %p239, %s238, 3
      %s241 = smul.addr %s240, 8
      %s242 = scalar_lea.vmem %s1, %s241
      %s243 = smul.u32 2, %s16
      %s244 = smul.u32 2, %s16
      %p245 = scmp.lt.s32.totalorder %s244, 3
      %s246 = scalar_select %p245, %s244, 3
      %s247 = smul.addr %s246, 8
      %s248 = scalar_lea.vmem %s5, %s247
      %s249 = smul.u32 2, %s16
      %v251 = vld [vmem:[%s236] sm:$0xff]
      %v252 = vld [vmem:[%s236 + $0x8] sm:$0xff]
      %v253 = vpack.c.bf16 %v252, %v251
      %v254 = vld [vmem:[%s2] sm:$0x7]
      %v255 = vld [vmem:[%s242] sm:$0xff]
      %v256 = vld [vmem:[%s242 + $0x8] sm:$0xff]
      %v257 = vpack.c.bf16 %v256, %v255
      %v258 = vld [vmem:[%s3] sm:$0x3]
      %vm259 = vcmask 31744
      %v261 = vsel %vm259, %v257, 0
      %vm263 = vcmask 1041408
      %v265 = vsel %vm263, %v258, 0
      %267 = vmatpush.bf16.msra.mxu0 0
      %268 = vmatpush.bf16.msra.mxu0 0
      %269 = vmatpush.bf16.msra.mxu0 0
      %270 = vmatpush.bf16.msra.mxu0 0
      %271 = vmatpush.bf16.msra.mxu0 0
      %272 = vmatpush.bf16.msra.mxu0 0
      %273 = vmatpush.bf16.msra.mxu0 0
      %274 = vmatpush.bf16.msra.mxu0 %v265
      %275 = vmatmul.bf16.gmra.mxu0 %v261
      %v276 = vpop.f32.mrf.mxu0
      %v277 = vadd.f32 0.0, %v276
      %v278 = vpop.f32.mrf.mxu0
      %v279 = vadd.f32 0.0, %v278
      %280 = vdwg.mxu0
      %vm281 = vcmask 48128
      %v283 = vsel %vm281, %v253, 0
      %vm285 = vcmask 1042432
      %v287 = vsel %vm285, %v254, 0
      %289 = vmatpush.bf16.msra.mxu0 0
      %290 = vmatpush.bf16.msra.mxu0 0
      %291 = vmatpush.bf16.msra.mxu0 0
      %292 = vmatpush.bf16.msra.mxu0 0
      %293 = vmatpush.bf16.msra.mxu0 0
      %294 = vmatpush.bf16.msra.mxu0 0
      %295 = vmatpush.bf16.msra.mxu0 0
      %296 = vmatpush.bf16.msra.mxu0 %v287
      %297 = vmatmul.bf16.gmra.mxu0 %v283
      %v298 = vpop.f32.mrf.mxu0
      %v299 = vadd.f32 %v277, %v298
      %v300 = vpop.f32.mrf.mxu0
      %v301 = vadd.f32 %v279, %v300
      %302 = vdwg.mxu0
      %v303 = vld [vmem:[%s4] sm:$0xff]
      %v304 = vld [vmem:[%s4 + $0x8] sm:$0xff]
      %v305 = vadd.f32 %v299, %v303
      %v306 = vadd.f32 %v301, %v304
      %vm307 = vcmask 261120
      %308 = vst.msk [vmem:[%s248] sm:$0xff] %vm307, %v305
      %309 = vst.msk [vmem:[%s248 + $0x8] sm:$0xff] %vm307, %v306
      %s310 = smul.u32 2, %s16
      %p311 = scmp.lt.s32.totalorder %s310, 3
      %s312 = scalar_select %p311, %s310, 3
      %s313 = smul.addr %s312, 8
      %s314 = scalar_lea.vmem %s5, %s313
      // Predicated region
      $region41: #{model_forward.4} parent=39 // pred_check
        %p315 = pneg %p149
      $region42: #{model_forward.4} parent=39 // pred_check_branch
        %317 = sbr.rel (%p315) target = $region44
      $region43: #{model_forward.4} parent=39 // pred_region
        %s318 = smul.u32 2, %s16
      $region44: #{model_forward.4} parent=39 // pred_fallthru
        _
    $region40: #{model_forward.4} parent=5 // pred_fallthru
      _
    %p319 = scmp.le.s32.totalorder 2, %s11
    // Predicated region
    $region45: #{model_forward.4} parent=5 // pred_check
      %p320 = pneg %p319
    $region46: #{model_forward.4} parent=5 // pred_check_branch
      %322 = sbr.rel (%p320) target = $region48
    $region47: #{model_forward.4} parent=5 // pred_region
      %s323 = ssub.s32 %s11, 2
      // Predicated region
      $region49: #{model_forward.4} parent=47 // pred_check
        %p324 = pneg %p155
      $region50: #{model_forward.4} parent=47 // pred_check_branch
        %326 = sbr.rel (%p324) target = $region52
      $region51: #{model_forward.4} parent=47 // pred_region
        %s327 = smul.u32 2, %s17
        %p328 = scmp.lt.s32.totalorder %s327, 3
        %s329 = scalar_select %p328, %s327, 3
        %s330 = smul.addr %s329, 8
        %s331 = scalar_lea.vmem %s5, %s330
      $region52: #{model_forward.4} parent=47 // pred_fallthru
        _
    $region48: #{model_forward.4} parent=5 // pred_fallthru
      _
  $region6: #{model_forward.4} parent=0 // loop_footer
    %s15 = sadd.s32 1, %s11
  $region7: #{model_forward.4} parent=0 // loop_footer_branch
    %10 = sbr.rel target = $region3
  $region8: #{model_forward.4} parent=0 // loop_exit
    _

// kernel: model_forward.5
$region0: #{model_forward.5}
  #allocation0 [shape = 'u32[]', space=smem, size = 0x4, offset = 0x4, fixed_abs, tag = 'smem constant byte address 0x4 - core index']
  #allocation1 [shape = 'u32[72,128]{1,0:T(1,128)}', space=vmem, size = 0x9000, scoped, tag = 'internal scratch']
  %s0 = inlined_call_operand.vmem [shape: f32[32,32], index: 0, kind: input, shape index: {}]
  %s1 = inlined_call_operand.vmem [shape: bf16[32,64], index: 1, kind: input, shape index: {}]
  %s2 = inlined_call_operand.vmem [shape: bf16[32,32], index: 2, kind: input, shape index: {}]
  %s3 = inlined_call_operand.vmem [shape: f32[1,32], index: 3, kind: input, shape index: {}, may-alias: {3,7,9,11}]
  %s4 = inlined_call_operand.vmem [shape: bf16[32,64], index: 4, kind: input, shape index: {}]
  %s5 = inlined_call_operand.vmem [shape: f32[1,64], index: 5, kind: input, shape index: {}]
  %s6 = inlined_call_operand.vmem [shape: bf16[64,32], index: 6, kind: input, shape index: {}]
  %s7 = inlined_call_operand.vmem [shape: f32[1,32], index: 7, kind: input, shape index: {}, may-alias: {3,7,9,11}]
  %s8 = inlined_call_operand.vmem [shape: f32[1,32], index: 8, kind: input, shape index: {}, may-alias: {8,10}]
  %s9 = inlined_call_operand.vmem [shape: f32[1,32], index: 9, kind: input, shape index: {}, may-alias: {3,7,9,11}]
  %s10 = inlined_call_operand.vmem [shape: f32[1,32], index: 10, kind: input, shape index: {}, may-alias: {8,10}]
  %s11 = inlined_call_operand.vmem [shape: f32[1,32], index: 11, kind: input, shape index: {}, may-alias: {3,7,9,11}]
  %s12 = inlined_call_operand.vmem [shape: f32[32,32], index: 12, kind: output, shape index: {}]
  %s13 = sld [smem:[#allocation0]]
  $region81: #{model_forward.5} parent=0
    _
  %s15 = ssub.s32 1, %s13
  %s16 = scalar_select 0, %s15, %s13
  loop: start=0, step=1, limit=4
  $region2: #{model_forward.5} parent=0 // loop_pre_header
    _
  $region3: #{model_forward.5} parent=0 // loop_header
    %s18 = sphi 0, %s22
    %p19 = scmp.ge.s32.totalorder %s18, 4
    %s28 = sphi 0, %s30
    %s31 = sphi 0, %s28
    %s32 = sphi 0, %s31
    %s48 = sphi 0, %s32
    %s52 = sphi 0, %s52
    %s54 = sphi 0, %s52
    %s55 = sphi 0, %s54
    %s69 = sphi 0, %s55
    %s73 = sphi 0, %s73
    %s75 = sphi 0, %s73
    %s76 = sphi 0, %s75
    %s90 = sphi 0, %s76
    %s94 = sphi 0, %s94
    %s96 = sphi 0, %s94
    %s97 = sphi 0, %s96
    %s111 = sphi 0, %s97
    %s115 = sphi 0, %s115
    %s117 = sphi 0, %s115
    %s118 = sphi 0, %s117
    %s132 = sphi 0, %s118
    %s136 = sphi 0, %s136
    %s138 = sphi 0, %s136
    %s139 = sphi 0, %s138
    %s153 = sphi 0, %s139
    %s157 = sphi 0, %s157
    %s159 = sphi 0, %s157
    %s160 = sphi 0, %s159
    %s174 = sphi 0, %s160
    %s178 = sphi 0, %s178
    %s180 = sphi 0, %s178
    %s181 = sphi 0, %s180
    %s195 = sphi 0, %s181
    %s199 = sphi 0, %s199
    %s201 = sphi 0, %s199
    %s202 = sphi 0, %s201
    %s216 = sphi 0, %s202
    %s220 = sphi 0, %s220
    %s222 = sphi 0, %s220
    %s223 = sphi 0, %s222
    %s237 = sphi 0, %s223
    %s241 = sphi 0, %s241
    %s243 = sphi 0, %s241
    %s244 = sphi 0, %s243
    %s258 = sphi 0, %s244
    %s262 = sphi 0, %s262
    %s264 = sphi 0, %s262
    %s265 = sphi 0, %s264
    %s279 = sphi 0, %s265
    %s285 = sphi 0, %s287
    %s288 = sphi 0, %s285
    %s289 = sphi 0, %s288
    %s305 = sphi 0, %s289
  $region4: #{model_forward.5} parent=0 // loop_header_branch
    %21 = sbr.rel (%p19) target = $region8
  $region5: #{model_forward.5} parent=0 // loop_body
    %s23 = ssub.s32 %s18, 1
    %s24 = ssub.s32 %s18, 2
    %s25 = sadd.s32 %s18, 1
    %s26 = ssub.s32 %s18, %s25
    %p27 = scmp.eq.s32.totalorder %s26, 0
    %s29 = sadd.s32 %s28, 1
    %s30 = scalar_select %p27, %s28, %s29
    %p33 = pneg %p27
    %p34 = scmp.eq.s32.totalorder %s18, 1
    %p35 = por %p33, %p34
    %p36 = scmp.ne.s32.totalorder %s28, %s31
    %p37 = scmp.eq.s32.totalorder %s18, 0
    %p38 = por %p36, %p37
    %p39 = scmp.ne.s32.totalorder %s28, %s31
    %p40 = scmp.eq.s32.totalorder %s23, 1
    %p41 = por %p39, %p40
    %p42 = scmp.ne.s32.totalorder %s31, %s32
    %p43 = scmp.eq.s32.totalorder %s23, 0
    %p44 = por %p42, %p43
    %p45 = scmp.ne.s32.totalorder %s31, %s32
    %p46 = scmp.eq.s32.totalorder %s24, 1
    %p47 = por %p45, %p46
    %p49 = scmp.ne.s32.totalorder %s32, %s48
    %p50 = scmp.eq.s32.totalorder %s24, 0
    %p51 = por %p49, %p50
    %s53 = sadd.s32 %s52, 1
    %p56 = scmp.eq.s32.totalorder %s18, 1
    %p57 = scmp.ne.s32.totalorder %s52, %s54
    %p58 = scmp.eq.s32.totalorder %s18, 0
    %p59 = por %p57, %p58
    %p60 = scmp.ne.s32.totalorder %s52, %s54
    %p61 = scmp.eq.s32.totalorder %s23, 1
    %p62 = por %p60, %p61
    %p63 = scmp.ne.s32.totalorder %s54, %s55
    %p64 = scmp.eq.s32.totalorder %s23, 0
    %p65 = por %p63, %p64
    %p66 = scmp.ne.s32.totalorder %s54, %s55
    %p67 = scmp.eq.s32.totalorder %s24, 1
    %p68 = por %p66, %p67
    %p70 = scmp.ne.s32.totalorder %s55, %s69
    %p71 = scmp.eq.s32.totalorder %s24, 0
    %p72 = por %p70, %p71
    %s74 = sadd.s32 %s73, 1
    %p77 = scmp.eq.s32.totalorder %s18, 1
    %p78 = scmp.ne.s32.totalorder %s73, %s75
    %p79 = scmp.eq.s32.totalorder %s18, 0
    %p80 = por %p78, %p79
    %p81 = scmp.ne.s32.totalorder %s73, %s75
    %p82 = scmp.eq.s32.totalorder %s23, 1
    %p83 = por %p81, %p82
    %p84 = scmp.ne.s32.totalorder %s75, %s76
    %p85 = scmp.eq.s32.totalorder %s23, 0
    %p86 = por %p84, %p85
    %p87 = scmp.ne.s32.totalorder %s75, %s76
    %p88 = scmp.eq.s32.totalorder %s24, 1
    %p89 = por %p87, %p88
    %p91 = scmp.ne.s32.totalorder %s76, %s90
    %p92 = scmp.eq.s32.totalorder %s24, 0
    %p93 = por %p91, %p92
    %s95 = sadd.s32 %s94, 1
    %p98 = scmp.eq.s32.totalorder %s18, 1
    %p99 = scmp.ne.s32.totalorder %s94, %s96
    %p100 = scmp.eq.s32.totalorder %s18, 0
    %p101 = por %p99, %p100
    %p102 = scmp.ne.s32.totalorder %s94, %s96
    %p103 = scmp.eq.s32.totalorder %s23, 1
    %p104 = por %p102, %p103
    %p105 = scmp.ne.s32.totalorder %s96, %s97
    %p106 = scmp.eq.s32.totalorder %s23, 0
    %p107 = por %p105, %p106
    %p108 = scmp.ne.s32.totalorder %s96, %s97
    %p109 = scmp.eq.s32.totalorder %s24, 1
    %p110 = por %p108, %p109
    %p112 = scmp.ne.s32.totalorder %s97, %s111
    %p113 = scmp.eq.s32.totalorder %s24, 0
    %p114 = por %p112, %p113
    %s116 = sadd.s32 %s115, 1
    %p119 = scmp.eq.s32.totalorder %s18, 1
    %p120 = scmp.ne.s32.totalorder %s115, %s117
    %p121 = scmp.eq.s32.totalorder %s18, 0
    %p122 = por %p120, %p121
    %p123 = scmp.ne.s32.totalorder %s115, %s117
    %p124 = scmp.eq.s32.totalorder %s23, 1
    %p125 = por %p123, %p124
    %p126 = scmp.ne.s32.totalorder %s117, %s118
    %p127 = scmp.eq.s32.totalorder %s23, 0
    %p128 = por %p126, %p127
    %p129 = scmp.ne.s32.totalorder %s117, %s118
    %p130 = scmp.eq.s32.totalorder %s24, 1
    %p131 = por %p129, %p130
    %p133 = scmp.ne.s32.totalorder %s118, %s132
    %p134 = scmp.eq.s32.totalorder %s24, 0
    %p135 = por %p133, %p134
    %s137 = sadd.s32 %s136, 1
    %p140 = scmp.eq.s32.totalorder %s18, 1
    %p141 = scmp.ne.s32.totalorder %s136, %s138
    %p142 = scmp.eq.s32.totalorder %s18, 0
    %p143 = por %p141, %p142
    %p144 = scmp.ne.s32.totalorder %s136, %s138
    %p145 = scmp.eq.s32.totalorder %s23, 1
    %p146 = por %p144, %p145
    %p147 = scmp.ne.s32.totalorder %s138, %s139
    %p148 = scmp.eq.s32.totalorder %s23, 0
    %p149 = por %p147, %p148
    %p150 = scmp.ne.s32.totalorder %s138, %s139
    %p151 = scmp.eq.s32.totalorder %s24, 1
    %p152 = por %p150, %p151
    %p154 = scmp.ne.s32.totalorder %s139, %s153
    %p155 = scmp.eq.s32.totalorder %s24, 0
    %p156 = por %p154, %p155
    %s158 = sadd.s32 %s157, 1
    %p161 = scmp.eq.s32.totalorder %s18, 1
    %p162 = scmp.ne.s32.totalorder %s157, %s159
    %p163 = scmp.eq.s32.totalorder %s18, 0
    %p164 = por %p162, %p163
    %p165 = scmp.ne.s32.totalorder %s157, %s159
    %p166 = scmp.eq.s32.totalorder %s23, 1
    %p167 = por %p165, %p166
    %p168 = scmp.ne.s32.totalorder %s159, %s160
    %p169 = scmp.eq.s32.totalorder %s23, 0
    %p170 = por %p168, %p169
    %p171 = scmp.ne.s32.totalorder %s159, %s160
    %p172 = scmp.eq.s32.totalorder %s24, 1
    %p173 = por %p171, %p172
    %p175 = scmp.ne.s32.totalorder %s160, %s174
    %p176 = scmp.eq.s32.totalorder %s24, 0
    %p177 = por %p175, %p176
    %s179 = sadd.s32 %s178, 1
    %p182 = scmp.eq.s32.totalorder %s18, 1
    %p183 = scmp.ne.s32.totalorder %s178, %s180
    %p184 = scmp.eq.s32.totalorder %s18, 0
    %p185 = por %p183, %p184
    %p186 = scmp.ne.s32.totalorder %s178, %s180
    %p187 = scmp.eq.s32.totalorder %s23, 1
    %p188 = por %p186, %p187
    %p189 = scmp.ne.s32.totalorder %s180, %s181
    %p190 = scmp.eq.s32.totalorder %s23, 0
    %p191 = por %p189, %p190
    %p192 = scmp.ne.s32.totalorder %s180, %s181
    %p193 = scmp.eq.s32.totalorder %s24, 1
    %p194 = por %p192, %p193
    %p196 = scmp.ne.s32.totalorder %s181, %s195
    %p197 = scmp.eq.s32.totalorder %s24, 0
    %p198 = por %p196, %p197
    %s200 = sadd.s32 %s199, 1
    %p203 = scmp.eq.s32.totalorder %s18, 1
    %p204 = scmp.ne.s32.totalorder %s199, %s201
    %p205 = scmp.eq.s32.totalorder %s18, 0
    %p206 = por %p204, %p205
    %p207 = scmp.ne.s32.totalorder %s199, %s201
    %p208 = scmp.eq.s32.totalorder %s23, 1
    %p209 = por %p207, %p208
    %p210 = scmp.ne.s32.totalorder %s201, %s202
    %p211 = scmp.eq.s32.totalorder %s23, 0
    %p212 = por %p210, %p211
    %p213 = scmp.ne.s32.totalorder %s201, %s202
    %p214 = scmp.eq.s32.totalorder %s24, 1
    %p215 = por %p213, %p214
    %p217 = scmp.ne.s32.totalorder %s202, %s216
    %p218 = scmp.eq.s32.totalorder %s24, 0
    %p219 = por %p217, %p218
    %s221 = sadd.s32 %s220, 1
    %p224 = scmp.eq.s32.totalorder %s18, 1
    %p225 = scmp.ne.s32.totalorder %s220, %s222
    %p226 = scmp.eq.s32.totalorder %s18, 0
    %p227 = por %p225, %p226
    %p228 = scmp.ne.s32.totalorder %s220, %s222
    %p229 = scmp.eq.s32.totalorder %s23, 1
    %p230 = por %p228, %p229
    %p231 = scmp.ne.s32.totalorder %s222, %s223
    %p232 = scmp.eq.s32.totalorder %s23, 0
    %p233 = por %p231, %p232
    %p234 = scmp.ne.s32.totalorder %s222, %s223
    %p235 = scmp.eq.s32.totalorder %s24, 1
    %p236 = por %p234, %p235
    %p238 = scmp.ne.s32.totalorder %s223, %s237
    %p239 = scmp.eq.s32.totalorder %s24, 0
    %p240 = por %p238, %p239
    %s242 = sadd.s32 %s241, 1
    %p245 = scmp.eq.s32.totalorder %s18, 1
    %p246 = scmp.ne.s32.totalorder %s241, %s243
    %p247 = scmp.eq.s32.totalorder %s18, 0
    %p248 = por %p246, %p247
    %p249 = scmp.ne.s32.totalorder %s241, %s243
    %p250 = scmp.eq.s32.totalorder %s23, 1
    %p251 = por %p249, %p250
    %p252 = scmp.ne.s32.totalorder %s243, %s244
    %p253 = scmp.eq.s32.totalorder %s23, 0
    %p254 = por %p252, %p253
    %p255 = scmp.ne.s32.totalorder %s243, %s244
    %p256 = scmp.eq.s32.totalorder %s24, 1
    %p257 = por %p255, %p256
    %p259 = scmp.ne.s32.totalorder %s244, %s258
    %p260 = scmp.eq.s32.totalorder %s24, 0
    %p261 = por %p259, %p260
    %s263 = sadd.s32 %s262, 1
    %p266 = scmp.eq.s32.totalorder %s18, 1
    %p267 = scmp.ne.s32.totalorder %s262, %s264
    %p268 = scmp.eq.s32.totalorder %s18, 0
    %p269 = por %p267, %p268
    %p270 = scmp.ne.s32.totalorder %s262, %s264
    %p271 = scmp.eq.s32.totalorder %s23, 1
    %p272 = por %p270, %p271
    %p273 = scmp.ne.s32.totalorder %s264, %s265
    %p274 = scmp.eq.s32.totalorder %s23, 0
    %p275 = por %p273, %p274
    %p276 = scmp.ne.s32.totalorder %s264, %s265
    %p277 = scmp.eq.s32.totalorder %s24, 1
    %p278 = por %p276, %p277
    %p280 = scmp.ne.s32.totalorder %s265, %s279
    %p281 = scmp.eq.s32.totalorder %s24, 0
    %p282 = por %p280, %p281
    %s283 = ssub.s32 %s18, %s25
    %p284 = scmp.eq.s32.totalorder %s283, 0
    %s286 = sadd.s32 %s285, 1
    %s287 = scalar_select %p284, %s285, %s286
    %p290 = pneg %p284
    %p291 = scmp.eq.s32.totalorder %s18, 1
    %p292 = por %p290, %p291
    %p293 = scmp.ne.s32.totalorder %s285, %s288
    %p294 = scmp.eq.s32.totalorder %s18, 0
    %p295 = por %p293, %p294
    %p296 = scmp.ne.s32.totalorder %s285, %s288
    %p297 = scmp.eq.s32.totalorder %s23, 1
    %p298 = por %p296, %p297
    %p299 = scmp.ne.s32.totalorder %s288, %s289
    %p300 = scmp.eq.s32.totalorder %s23, 0
    %p301 = por %p299, %p300
    %p302 = scmp.ne.s32.totalorder %s288, %s289
    %p303 = scmp.eq.s32.totalorder %s24, 1
    %p304 = por %p302, %p303
    %p306 = scmp.ne.s32.totalorder %s289, %s305
    %p307 = scmp.eq.s32.totalorder %s24, 0
    %p308 = por %p306, %p307
    %p309 = scmp.le.s32.totalorder 1, %s18
    %p310 = scmp.lt.s32.totalorder %s18, 3
    %p311 = pnand %p309, %p310
    %p312 = pneg %p311
    // Predicated region
    $region9: #{model_forward.5} parent=5 // pred_check
      _
    $region10: #{model_forward.5} parent=5 // pred_check_branch
      %314 = sbr.rel (%p311) target = $region12
    $region11: #{model_forward.5} parent=5 // pred_region
      %s315 = ssub.s32 %s18, 1
      // Predicated region
      $region13: #{model_forward.5} parent=11 // pred_check
        %p316 = pneg %p65
      $region14: #{model_forward.5} parent=11 // pred_check_branch
        %318 = sbr.rel (%p316) target = $region16
      $region15: #{model_forward.5} parent=11 // pred_region
        _
      $region16: #{model_forward.5} parent=11 // pred_fallthru
        _
      // Predicated region
      $region17: #{model_forward.5} parent=11 // pred_check
        %p319 = pneg %p86
      $region18: #{model_forward.5} parent=11 // pred_check_branch
        %321 = sbr.rel (%p319) target = $region20
      $region19: #{model_forward.5} parent=11 // pred_region
        _
      $region20: #{model_forward.5} parent=11 // pred_fallthru
        _
      // Predicated region
      $region21: #{model_forward.5} parent=11 // pred_check
        %p322 = pneg %p107
      $region22: #{model_forward.5} parent=11 // pred_check_branch
        %324 = sbr.rel (%p322) target = $region24
      $region23: #{model_forward.5} parent=11 // pred_region
        _
      $region24: #{model_forward.5} parent=11 // pred_fallthru
        _
      // Predicated region
      $region25: #{model_forward.5} parent=11 // pred_check
        %p325 = pneg %p128
      $region26: #{model_forward.5} parent=11 // pred_check_branch
        %327 = sbr.rel (%p325) target = $region28
      $region27: #{model_forward.5} parent=11 // pred_region
        _
      $region28: #{model_forward.5} parent=11 // pred_fallthru
        _
      // Predicated region
      $region29: #{model_forward.5} parent=11 // pred_check
        %p328 = pneg %p149
      $region30: #{model_forward.5} parent=11 // pred_check_branch
        %330 = sbr.rel (%p328) target = $region32
      $region31: #{model_forward.5} parent=11 // pred_region
        _
      $region32: #{model_forward.5} parent=11 // pred_fallthru
        _
      // Predicated region
      $region33: #{model_forward.5} parent=11 // pred_check
        %p331 = pneg %p170
      $region34: #{model_forward.5} parent=11 // pred_check_branch
        %333 = sbr.rel (%p331) target = $region36
      $region35: #{model_forward.5} parent=11 // pred_region
        _
      $region36: #{model_forward.5} parent=11 // pred_fallthru
        _
      // Predicated region
      $region37: #{model_forward.5} parent=11 // pred_check
        %p334 = pneg %p191
      $region38: #{model_forward.5} parent=11 // pred_check_branch
        %336 = sbr.rel (%p334) target = $region40
      $region39: #{model_forward.5} parent=11 // pred_region
        _
      $region40: #{model_forward.5} parent=11 // pred_fallthru
        _
      // Predicated region
      $region41: #{model_forward.5} parent=11 // pred_check
        %p337 = pneg %p212
      $region42: #{model_forward.5} parent=11 // pred_check_branch
        %339 = sbr.rel (%p337) target = $region44
      $region43: #{model_forward.5} parent=11 // pred_region
        _
      $region44: #{model_forward.5} parent=11 // pred_fallthru
        _
      // Predicated region
      $region45: #{model_forward.5} parent=11 // pred_check
        %p340 = pneg %p233
      $region46: #{model_forward.5} parent=11 // pred_check_branch
        %342 = sbr.rel (%p340) target = $region48
      $region47: #{model_forward.5} parent=11 // pred_region
        _
      $region48: #{model_forward.5} parent=11 // pred_fallthru
        _
      // Predicated region
      $region49: #{model_forward.5} parent=11 // pred_check
        %p343 = pneg %p254
      $region50: #{model_forward.5} parent=11 // pred_check_branch
        %345 = sbr.rel (%p343) target = $region52
      $region51: #{model_forward.5} parent=11 // pred_region
        _
      $region52: #{model_forward.5} parent=11 // pred_fallthru
        _
      // Predicated region
      $region53: #{model_forward.5} parent=11 // pred_check
        %p346 = pneg %p275
      $region54: #{model_forward.5} parent=11 // pred_check_branch
        %348 = sbr.rel (%p346) target = $region56
      $region55: #{model_forward.5} parent=11 // pred_region
        _
      $region56: #{model_forward.5} parent=11 // pred_fallthru
        _
    $region12: #{model_forward.5} parent=5 // pred_fallthru
      _
    %p349 = scmp.lt.s32.totalorder %s18, 2
    // Predicated region
    $region57: #{model_forward.5} parent=5 // pred_check
      %p350 = pneg %p349
    $region58: #{model_forward.5} parent=5 // pred_check_branch
      %352 = sbr.rel (%p350) target = $region60
    $region59: #{model_forward.5} parent=5 // pred_region
      // Predicated region
      $region61: #{model_forward.5} parent=59 // pred_check
        %p353 = pneg %p38
      $region62: #{model_forward.5} parent=59 // pred_check_branch
        %355 = sbr.rel (%p353) target = $region64
      $region63: #{model_forward.5} parent=59 // pred_region
        %s356 = smul.u32 2, %s18
        %p357 = scmp.lt.s32.totalorder %s356, 3
        %s358 = scalar_select %p357, %s356, 3
        %s359 = smul.addr %s358, 8
        %s360 = scalar_lea.vmem %s0, %s359
        %s361 = smul.u32 2, %s18
      $region64: #{model_forward.5} parent=59 // pred_fallthru
        _
    $region60: #{model_forward.5} parent=5 // pred_fallthru
      _
    %p362 = scmp.le.s32.totalorder 1, %s18
    %p363 = scmp.lt.s32.totalorder %s18, 3
    %p364 = pnand %p362, %p363
    %p365 = pneg %p364
    // Predicated region
    $region65: #{model_forward.5} parent=5 // pred_check
      _
    $region66: #{model_forward.5} parent=5 // pred_check_branch
      %367 = sbr.rel (%p364) target = $region68
    $region67: #{model_forward.5} parent=5 // pred_region
      %s368 = ssub.s32 %s18, 1
      %s369 = smul.u32 2, %s23
      %p370 = scmp.lt.s32.totalorder %s369, 3
      %s371 = scalar_select %p370, %s369, 3
      %s372 = smul.addr %s371, 8
      %s373 = scalar_lea.vmem %s0, %s372
      %p374 = pneg %p44
      %p375 = pneg %p41
      %p376 = pneg %p65
      %p377 = pneg %p62
      %p378 = pneg %p86
      %p379 = pneg %p83
      %p380 = pneg %p107
      %p381 = pneg %p104
      %p382 = pneg %p128
      %p383 = pneg %p125
      %p384 = pneg %p149
      %p385 = pneg %p146
      %p386 = pneg %p170
      %p387 = pneg %p167
      %p388 = pneg %p191
      %p389 = pneg %p188
      %p390 = pneg %p212
      %p391 = pneg %p209
      %p392 = pneg %p233
      %p393 = pneg %p230
      %p394 = pneg %p254
      %p395 = pneg %p251
      %p396 = pneg %p275
      %p397 = pneg %p272
      %p398 = pneg %p301
      %p399 = pneg %p298
      %s400 = smul.u32 2, %s23
      %p401 = scmp.lt.s32.totalorder %s400, 3
      %s402 = scalar_select %p401, %s400, 3
      %s403 = smul.addr %s402, 8
      %s404 = scalar_lea.vmem %s12, %s403
      %s405 = smul.u32 2, %s23
      %p406 = scmp.lt.s32.totalorder %s405, 3
      %s407 = scalar_select %p406, %s405, 3
      %s408 = smul.addr %s407, 8
      %s409 = scalar_lea.vmem %s0, %s408
      %s410 = smul.u32 2, %s23
      %s411 = smul.u32 2, %s23
      %p412 = scmp.lt.s32.totalorder %s411, 3
      %s413 = scalar_select %p412, %s411, 3
      %s414 = smul.addr %s413, 8
      %s415 = scalar_lea.vmem %s12, %s414
      %s416 = smul.u32 2, %s23
      %v418 = vld [vmem:[%s409] sm:$0xff]
      %v419 = vld [vmem:[%s409 + $0x8] sm:$0xff]
      %v420 = vpack.c.bf16 %v419, %v418
      %v421 = vld [vmem:[%s1] sm:$0xf]
      %v422 = vld [vmem:[%s1 + $0x4] sm:$0xf]
      %v423 = vld [vmem:[%s1 + $0x8] sm:$0xf]
      %v424 = vld [vmem:[%s1 + $0xc] sm:$0xf]
      %v429 = vunpack.c.l.b16 %v421
      %v430 = vunpack.c.l.b16 %v422
      %v431 = vunpack.c.l.b16 %v423
      %v432 = vunpack.c.l.b16 %v424
      %v433 = vpack.c.b16 %v430, %v429
      %v434 = vpack.c.b16 %v432, %v431
      %vm437 = vcmask 261120
      %v439 = vsel %vm437, %v420, 0
      %441 = vmatpush.bf16.msra.mxu0 0
      %442 = vmatpush.bf16.msra.mxu0 0
      %443 = vmatpush.bf16.msra.mxu0 0
      %444 = vmatpush.bf16.msra.mxu0 0
      %445 = vmatpush.bf16.msra.mxu0 0
      %446 = vmatpush.bf16.msra.mxu0 0
      %447 = vmatpush.bf16.msra.mxu0 %v434
      %448 = vmatpush.bf16.msra.mxu0 %v433
      %449 = vmatmul.bf16.gmra.mxu0 %v439
      %v450 = vpop.f32.mrf.mxu0
      %v451 = vadd.f32 0.0, %v450
      %v452 = vpop.f32.mrf.mxu0
      %v453 = vadd.f32 0.0, %v452
      %454 = vdwg.mxu0
      %v455 = vlaneseq
      %v456 = vshrl.u32 %v455, 7
      %v457 = vadd.s32 %v456, 8
      %v458 = vlaneseq
      %v459 = vand.u32 %v458, 127
      %vm460 = vcmp.eq.s32.totalorder %v456, %v459
      %vm461 = vcmp.eq.s32.totalorder %v457, %v459
      %v462 = vmul.f32 %v451, %v451
      %v463 = vmul.f32 %v453, %v453
      %vm464 = vcmask 64512
      %v465 = vsel %vm464, %v462, 0.0
      %466 = vadd.xlane.f32.xlu0 %v465
      %v467 = vpop.xlane.xlu0 %466
      %v468 = vsel %vm464, %v463, 0.0
      %469 = vadd.xlane.f32.xlu0 %v468
      %v470 = vpop.xlane.xlu0 %469
      %v471 = vadd.f32 %v467, 1e-24
      %v472 = vadd.f32 %v470, 1e-24
      %v473 = vrsqrt.pop %v471
      %v474 = vmul.f32 %v473, %v471
      %v475 = vmul.f32 %v474, %v473
      %v476 = vmul.f32 0.5, %v475
      %v477 = vsub.f32 1.5, %v476
      %v478 = vmul.f32 %v473, %v477
      %vm479 = vweird.f32 %v471
      %vm480 = vweird.f32 %v473
      %vm481 = vmor %vm479, %vm480
      %v482 = vsel %vm481, %v473, %v478
      %v483 = vrsqrt.pop %v472
      %v484 = vmul.f32 %v483, %v472
      %v485 = vmul.f32 %v484, %v483
      %v486 = vmul.f32 0.5, %v485
      %v487 = vsub.f32 1.5, %v486
      %v488 = vmul.f32 %v483, %v487
      %vm489 = vweird.f32 %v472
      %vm490 = vweird.f32 %v483
      %vm491 = vmor %vm489, %vm490
      %v492 = vsel %vm491, %v483, %v488
      %v493 = vmul.f32 %v451, %v482
      %v494 = vmul.f32 %v453, %v492
      %v495 = vpack.c.bf16 %v453, %v451
      %v496 = vpack.c.bf16 %v494, %v493
      %v498 = vsel %vm464, %v495, 0
      %v501 = vsel %vm464, %v496, 0
      %503 = vmatpush.bf16.xpose.msra.mxu0 0
      %504 = vmatpush.bf16.xpose.msra.mxu0 0
      %505 = vmatpush.bf16.xpose.msra.mxu0 0
      %506 = vmatpush.bf16.xpose.msra.mxu0 0
      %507 = vmatpush.bf16.xpose.msra.mxu0 0
      %508 = vmatpush.bf16.xpose.msra.mxu0 0
      %509 = vmatpush.bf16.xpose.msra.mxu0 0
      %510 = vmatpush.bf16.xpose.msra.mxu0 %v501
      %511 = vmatmul.bf16.gmra.mxu0 %v498
      %v512 = vpop.f32.mrf.mxu0
      %v513 = vadd.f32 0.0, %v512
      %v514 = vpop.f32.mrf.mxu0
      %v515 = vadd.f32 0.0, %v514
      %516 = vdwg.mxu0
      %v517 = vmul.f32 %v513, 0.35355338
      %v518 = vmul.f32 %v515, 0.35355338
      %v519 = vsel %vm460, -50000.0, %v517
      %v520 = vsel %vm461, -50000.0, %v518
      %vm521 = vcmask 130048
      %v522 = vsel %vm521, %v519, -inf
      %523 = vmax.xlane.f32.xlu0 %v522
      %v524 = vpop.xlane.xlu0 %523
      %v525 = vsel %vm521, %v520, -inf
      %526 = vmax.xlane.f32.xlu0 %v525
      %v527 = vpop.xlane.xlu0 %526
      %v528 = vsub.f32 %v519, %v524
      %v529 = vsub.f32 %v520, %v527
      %v530 = vmul.f32 %v528, 1.442695
      %v531 = vpow.pop %v530
      %v532 = vmul.f32 %v529, 1.442695
      %v533 = vpow.pop %v532
      %v534 = vsel %vm521, %v531, 0.0
      %535 = vadd.xlane.f32.xlu0 %v534
      %v536 = vpop.xlane.xlu0 %535
      %v537 = vsel %vm521, %v533, 0.0
      %538 = vadd.xlane.f32.xlu0 %v537
      %v539 = vpop.xlane.xlu0 %538
      %v540 = vrcp.pop %v536
      %v541 = vrcp.pop %v539
      %v542 = vmul.f32 %v531, %v540
      %v543 = vmul.f32 %v533, %v541
      %v544 = vpack.c.bf16 %v543, %v542
      %546 = vrot.lane.b32.xlu0 %v495, 96
      %v547 = vpop.permute.xlu0 %546
      %v550 = vsel %vm521, %v544, 0
      %552 = vmatpush.bf16.msra.mxu0 0
      %553 = vmatpush.bf16.msra.mxu0 0
      %554 = vmatpush.bf16.msra.mxu0 0
      %555 = vmatpush.bf16.msra.mxu0 0
      %556 = vmatpush.bf16.msra.mxu0 0
      %557 = vmatpush.bf16.msra.mxu0 0
      %558 = vmatpush.bf16.msra.mxu0 0
      %559 = vmatpush.bf16.msra.mxu0 %v547
      %560 = vmatmul.bf16.gmra.mxu0 %v550
      %v561 = vpop.f32.mrf.mxu0
      %v562 = vadd.f32 0.0, %v561
      %v563 = vpop.f32.mrf.mxu0
      %v564 = vadd.f32 0.0, %v563
      %565 = vdwg.mxu0
      %568 = vrot.lane.b32.xlu0 %v462, 120
      %v569 = vpop.permute.xlu0 %568
      %570 = vrot.lane.b32.xlu0 %v463, 120
      %v571 = vpop.permute.xlu0 %570
      %v574 = vsel %vm464, %v569, 0.0
      %575 = vadd.xlane.f32.xlu0 %v574
      %v576 = vpop.xlane.xlu0 %575
      %v577 = vsel %vm464, %v571, 0.0
      %578 = vadd.xlane.f32.xlu0 %v577
      %v579 = vpop.xlane.xlu0 %578
      %v580 = vadd.f32 %v576, 1e-24
      %v581 = vadd.f32 %v579, 1e-24
      %v582 = vrsqrt.pop %v580
      %v583 = vmul.f32 %v582, %v580
      %v584 = vmul.f32 %v583, %v582
      %v585 = vmul.f32 0.5, %v584
      %v586 = vsub.f32 1.5, %v585
      %v587 = vmul.f32 %v582, %v586
      %vm588 = vweird.f32 %v580
      %vm589 = vweird.f32 %v582
      %vm590 = vmor %vm588, %vm589
      %v591 = vsel %vm590, %v582, %v587
      %v592 = vrsqrt.pop %v581
      %v593 = vmul.f32 %v592, %v581
      %v594 = vmul.f32 %v593, %v592
      %v595 = vmul.f32 0.5, %v594
      %v596 = vsub.f32 1.5, %v595
      %v597 = vmul.f32 %v592, %v596
      %vm598 = vweird.f32 %v581
      %vm599 = vweird.f32 %v592
      %vm600 = vmor %vm598, %vm599
      %v601 = vsel %vm600, %v592, %v597
      %v602 = vmul.f32 %v451, %v591
      %v603 = vmul.f32 %v453, %v601
      %v604 = vpack.c.bf16 %v603, %v602
      %605 = vrot.lane.b32.xlu0 %v495, 120
      %v606 = vpop.permute.xlu0 %605
      %608 = vrot.lane.b32.xlu0 %v604, 120
      %v609 = vpop.permute.xlu0 %608
      %v611 = vsel %vm464, %v606, 0
      %v614 = vsel %vm464, %v609, 0
      %616 = vmatpush.bf16.xpose.msra.mxu0 0
      %617 = vmatpush.bf16.xpose.msra.mxu0 0
      %618 = vmatpush.bf16.xpose.msra.mxu0 0
      %619 = vmatpush.bf16.xpose.msra.mxu0 0
      %620 = vmatpush.bf16.xpose.msra.mxu0 0
      %621 = vmatpush.bf16.xpose.msra.mxu0 0
      %622 = vmatpush.bf16.xpose.msra.mxu0 0
      %623 = vmatpush.bf16.xpose.msra.mxu0 %v614
      %624 = vmatmul.bf16.gmra.mxu0 %v611
      %v625 = vpop.f32.mrf.mxu0
      %v626 = vadd.f32 0.0, %v625
      %v627 = vpop.f32.mrf.mxu0
      %v628 = vadd.f32 0.0, %v627
      %629 = vdwg.mxu0
      %v630 = vmul.f32 %v626, 0.35355338
      %v631 = vmul.f32 %v628, 0.35355338
      %v632 = vsel %vm460, -50000.0, %v630
      %v633 = vsel %vm461, -50000.0, %v631
      %v634 = vsel %vm521, %v632, -inf
      %635 = vmax.xlane.f32.xlu0 %v634
      %v636 = vpop.xlane.xlu0 %635
      %v637 = vsel %vm521, %v633, -inf
      %638 = vmax.xlane.f32.xlu0 %v637
      %v639 = vpop.xlane.xlu0 %638
      %v640 = vsub.f32 %v632, %v636
      %v641 = vsub.f32 %v633, %v639
      %v642 = vmul.f32 %v640, 1.442695
      %v643 = vpow.pop %v642
      %v644 = vmul.f32 %v641, 1.442695
      %v645 = vpow.pop %v644
      %v646 = vsel %vm521, %v643, 0.0
      %647 = vadd.xlane.f32.xlu0 %v646
      %v648 = vpop.xlane.xlu0 %647
      %v649 = vsel %vm521, %v645, 0.0
      %650 = vadd.xlane.f32.xlu0 %v649
      %v651 = vpop.xlane.xlu0 %650
      %v652 = vrcp.pop %v648
      %v653 = vrcp.pop %v651
      %v654 = vmul.f32 %v643, %v652
      %v655 = vmul.f32 %v645, %v653
      %v656 = vpack.c.bf16 %v655, %v654
      %657 = vrot.lane.b32.xlu0 %v495, 88
      %v658 = vpop.permute.xlu0 %657
      %v661 = vsel %vm521, %v656, 0
      %663 = vmatpush.bf16.msra.mxu0 0
      %664 = vmatpush.bf16.msra.mxu0 0
      %665 = vmatpush.bf16.msra.mxu0 0
      %666 = vmatpush.bf16.msra.mxu0 0
      %667 = vmatpush.bf16.msra.mxu0 0
      %668 = vmatpush.bf16.msra.mxu0 0
      %669 = vmatpush.bf16.msra.mxu0 0
      %670 = vmatpush.bf16.msra.mxu0 %v658
      %671 = vmatmul.bf16.gmra.mxu0 %v661
      %v672 = vpop.f32.mrf.mxu0
      %v673 = vadd.f32 0.0, %v672
      %v674 = vpop.f32.mrf.mxu0
      %v675 = vadd.f32 0.0, %v674
      %676 = vdwg.mxu0
      %677 = vrot.lane.b32.xlu0 %v462, 112
      %v678 = vpop.permute.xlu0 %677
      %679 = vrot.lane.b32.xlu0 %v463, 112
      %v680 = vpop.permute.xlu0 %679
      %v683 = vsel %vm464, %v678, 0.0
      %684 = vadd.xlane.f32.xlu0 %v683
      %v685 = vpop.xlane.xlu0 %684
      %v686 = vsel %vm464, %v680, 0.0
      %687 = vadd.xlane.f32.xlu0 %v686
      %v688 = vpop.xlane.xlu0 %687
      %v689 = vadd.f32 %v685, 1e-24
      %v690 = vadd.f32 %v688, 1e-24
      %v691 = vrsqrt.pop %v689
      %v692 = vmul.f32 %v691, %v689
      %v693 = vmul.f32 %v692, %v691
      %v694 = vmul.f32 0.5, %v693
      %v695 = vsub.f32 1.5, %v694
      %v696 = vmul.f32 %v691, %v695
      %vm697 = vweird.f32 %v689
      %vm698 = vweird.f32 %v691
      %vm699 = vmor %vm697, %vm698
      %v700 = vsel %vm699, %v691, %v696
      %v701 = vrsqrt.pop %v690
      %v702 = vmul.f32 %v701, %v690
      %v703 = vmul.f32 %v702, %v701
      %v704 = vmul.f32 0.5, %v703
      %v705 = vsub.f32 1.5, %v704
      %v706 = vmul.f32 %v701, %v705
      %vm707 = vweird.f32 %v690
      %vm708 = vweird.f32 %v701
      %vm709 = vmor %vm707, %vm708
      %v710 = vsel %vm709, %v701, %v706
      %v711 = vmul.f32 %v451, %v700
      %v712 = vmul.f32 %v453, %v710
      %v713 = vpack.c.bf16 %v712, %v711
      %714 = vrot.lane.b32.xlu0 %v495, 112
      %v715 = vpop.permute.xlu0 %714
      %717 = vrot.lane.b32.xlu0 %v713, 112
      %v718 = vpop.permute.xlu0 %717
      %v720 = vsel %vm464, %v715, 0
      %v723 = vsel %vm464, %v718, 0
      %725 = vmatpush.bf16.xpose.msra.mxu0 0
      %726 = vmatpush.bf16.xpose.msra.mxu0 0
      %727 = vmatpush.bf16.xpose.msra.mxu0 0
      %728 = vmatpush.bf16.xpose.msra.mxu0 0
      %729 = vmatpush.bf16.xpose.msra.mxu0 0
      %730 = vmatpush.bf16.xpose.msra.mxu0 0
      %731 = vmatpush.bf16.xpose.msra.mxu0 0
      %732 = vmatpush.bf16.xpose.msra.mxu0 %v723
      %733 = vmatmul.bf16.gmra.mxu0 %v720
      %v734 = vpop.f32.mrf.mxu0
      %v735 = vadd.f32 0.0, %v734
      %v736 = vpop.f32.mrf.mxu0
      %v737 = vadd.f32 0.0, %v736
      %738 = vdwg.mxu0
      %v739 = vmul.f32 %v735, 0.35355338
      %v740 = vmul.f32 %v737, 0.35355338
      %v741 = vsel %vm460, -50000.0, %v739
      %v742 = vsel %vm461, -50000.0, %v740
      %v743 = vsel %vm521, %v741, -inf
      %744 = vmax.xlane.f32.xlu0 %v743
      %v745 = vpop.xlane.xlu0 %744
      %v746 = vsel %vm521, %v742, -inf
      %747 = vmax.xlane.f32.xlu0 %v746
      %v748 = vpop.xlane.xlu0 %747
      %v749 = vsub.f32 %v741, %v745
      %v750 = vsub.f32 %v742, %v748
      %v751 = vmul.f32 %v749, 1.442695
      %v752 = vpow.pop %v751
      %v753 = vmul.f32 %v750, 1.442695
      %v754 = vpow.pop %v753
      %v755 = vsel %vm521, %v752, 0.0
      %756 = vadd.xlane.f32.xlu0 %v755
      %v757 = vpop.xlane.xlu0 %756
      %v758 = vsel %vm521, %v754, 0.0
      %759 = vadd.xlane.f32.xlu0 %v758
      %v760 = vpop.xlane.xlu0 %759
      %v761 = vrcp.pop %v757
      %v762 = vrcp.pop %v760
      %v763 = vmul.f32 %v752, %v761
      %v764 = vmul.f32 %v754, %v762
      %v765 = vpack.c.bf16 %v764, %v763
      %766 = vrot.lane.b32.xlu0 %v495, 80
      %v767 = vpop.permute.xlu0 %766
      %v770 = vsel %vm521, %v765, 0
      %772 = vmatpush.bf16.msra.mxu0 0
      %773 = vmatpush.bf16.msra.mxu0 0
      %774 = vmatpush.bf16.msra.mxu0 0
      %775 = vmatpush.bf16.msra.mxu0 0
      %776 = vmatpush.bf16.msra.mxu0 0
      %777 = vmatpush.bf16.msra.mxu0 0
      %778 = vmatpush.bf16.msra.mxu0 0
      %779 = vmatpush.bf16.msra.mxu0 %v767
      %780 = vmatmul.bf16.gmra.mxu0 %v770
      %v781 = vpop.f32.mrf.mxu0
      %v782 = vadd.f32 0.0, %v781
      %v783 = vpop.f32.mrf.mxu0
      %v784 = vadd.f32 0.0, %v783
      %785 = vdwg.mxu0
      %786 = vrot.lane.b32.xlu0 %v462, 104
      %v787 = vpop.permute.xlu0 %786
      %788 = vrot.lane.b32.xlu0 %v463, 104
      %v789 = vpop.permute.xlu0 %788
      %v792 = vsel %vm464, %v787, 0.0
      %793 = vadd.xlane.f32.xlu0 %v792
      %v794 = vpop.xlane.xlu0 %793
      %v795 = vsel %vm464, %v789, 0.0
      %796 = vadd.xlane.f32.xlu0 %v795
      %v797 = vpop.xlane.xlu0 %796
      %v798 = vadd.f32 %v794, 1e-24
      %v799 = vadd.f32 %v797, 1e-24
      %v800 = vrsqrt.pop %v798
      %v801 = vmul.f32 %v800, %v798
      %v802 = vmul.f32 %v801, %v800
      %v803 = vmul.f32 0.5, %v802
      %v804 = vsub.f32 1.5, %v803
      %v805 = vmul.f32 %v800, %v804
      %vm806 = vweird.f32 %v798
      %vm807 = vweird.f32 %v800
      %vm808 = vmor %vm806, %vm807
      %v809 = vsel %vm808, %v800, %v805
      %v810 = vrsqrt.pop %v799
      %v811 = vmul.f32 %v810, %v799
      %v812 = vmul.f32 %v811, %v810
      %v813 = vmul.f32 0.5, %v812
      %v814 = vsub.f32 1.5, %v813
      %v815 = vmul.f32 %v810, %v814
      %vm816 = vweird.f32 %v799
      %vm817 = vweird.f32 %v810
      %vm818 = vmor %vm816, %vm817
      %v819 = vsel %vm818, %v810, %v815
      %v820 = vmul.f32 %v451, %v809
      %v821 = vmul.f32 %v453, %v819
      %v822 = vpack.c.bf16 %v821, %v820
      %823 = vrot.lane.b32.xlu0 %v495, 104
      %v824 = vpop.permute.xlu0 %823
      %826 = vrot.lane.b32.xlu0 %v822, 104
      %v827 = vpop.permute.xlu0 %826
      %v829 = vsel %vm464, %v824, 0
      %v832 = vsel %vm464, %v827, 0
      %834 = vmatpush.bf16.xpose.msra.mxu0 0
      %835 = vmatpush.bf16.xpose.msra.mxu0 0
      %836 = vmatpush.bf16.xpose.msra.mxu0 0
      %837 = vmatpush.bf16.xpose.msra.mxu0 0
      %838 = vmatpush.bf16.xpose.msra.mxu0 0
      %839 = vmatpush.bf16.xpose.msra.mxu0 0
      %840 = vmatpush.bf16.xpose.msra.mxu0 0
      %841 = vmatpush.bf16.xpose.msra.mxu0 %v832
      %842 = vmatmul.bf16.gmra.mxu0 %v829
      %v843 = vpop.f32.mrf.mxu0
      %v844 = vadd.f32 0.0, %v843
      %v845 = vpop.f32.mrf.mxu0
      %v846 = vadd.f32 0.0, %v845
      %847 = vdwg.mxu0
      %v848 = vmul.f32 %v844, 0.35355338
      %v849 = vmul.f32 %v846, 0.35355338
      %v850 = vsel %vm460, -50000.0, %v848
      %v851 = vsel %vm461, -50000.0, %v849
      %v852 = vsel %vm521, %v850, -inf
      %853 = vmax.xlane.f32.xlu0 %v852
      %v854 = vpop.xlane.xlu0 %853
      %v855 = vsel %vm521, %v851, -inf
      %856 = vmax.xlane.f32.xlu0 %v855
      %v857 = vpop.xlane.xlu0 %856
      %v858 = vsub.f32 %v850, %v854
      %v859 = vsub.f32 %v851, %v857
      %v860 = vmul.f32 %v858, 1.442695
      %v861 = vpow.pop %v860
      %v862 = vmul.f32 %v859, 1.442695
      %v863 = vpow.pop %v862
      %v864 = vsel %vm521, %v861, 0.0
      %865 = vadd.xlane.f32.xlu0 %v864
      %v866 = vpop.xlane.xlu0 %865
      %v867 = vsel %vm521, %v863, 0.0
      %868 = vadd.xlane.f32.xlu0 %v867
      %v869 = vpop.xlane.xlu0 %868
      %v870 = vrcp.pop %v866
      %v871 = vrcp.pop %v869
      %v872 = vmul.f32 %v861, %v870
      %v873 = vmul.f32 %v863, %v871
      %v874 = vpack.c.bf16 %v873, %v872
      %875 = vrot.lane.b32.xlu0 %v495, 72
      %v876 = vpop.permute.xlu0 %875
      %v879 = vsel %vm521, %v874, 0
      %881 = vmatpush.bf16.msra.mxu0 0
      %882 = vmatpush.bf16.msra.mxu0 0
      %883 = vmatpush.bf16.msra.mxu0 0
      %884 = vmatpush.bf16.msra.mxu0 0
      %885 = vmatpush.bf16.msra.mxu0 0
      %886 = vmatpush.bf16.msra.mxu0 0
      %887 = vmatpush.bf16.msra.mxu0 0
      %888 = vmatpush.bf16.msra.mxu0 %v876
      %889 = vmatmul.bf16.gmra.mxu0 %v879
      %v890 = vpop.f32.mrf.mxu0
      %v891 = vadd.f32 0.0, %v890
      %v892 = vpop.f32.mrf.mxu0
      %v893 = vadd.f32 0.0, %v892
      %894 = vdwg.mxu0
      %897 = vrot.lane.b32.xlu0 %v673, 8
      %v898 = vpop.permute.xlu0 %897
      %899 = vrot.lane.b32.xlu0 %v675, 8
      %v900 = vpop.permute.xlu0 %899
      %905 = vrot.lane.b32.xlu0 %v782, 16
      %v906 = vpop.permute.xlu0 %905
      %907 = vrot.lane.b32.xlu0 %v784, 16
      %v908 = vpop.permute.xlu0 %907
      %913 = vrot.lane.b32.xlu0 %v891, 24
      %v914 = vpop.permute.xlu0 %913
      %915 = vrot.lane.b32.xlu0 %v893, 24
      %v916 = vpop.permute.xlu0 %915
      %v919 = vsel %vm464, %v562, %v898
      %v920 = vsel %vm464, %v564, %v900
      %v921 = vsel %vm521, %v919, %v906
      %v922 = vsel %vm521, %v920, %v908
      %vm923 = vcmask 195584
      %v924 = vsel %vm923, %v921, %v914
      %v925 = vsel %vm923, %v922, %v916
      %v926 = vpack.c.bf16 %v925, %v924
      %v927 = vld [vmem:[%s2] sm:$0xf]
      %v928 = vld [vmem:[%s2 + $0x4] sm:$0xf]
      %v929 = vld [vmem:[%s2 + $0x8] sm:$0xf]
      %v930 = vld [vmem:[%s2 + $0xc] sm:$0xf]
      %v931 = vld [vmem:[%s3] sm:$0x1]
      %v933 = vperm.slane %v931, 0
      %v939 = vunpack.c.l.b16 %v927
      %v940 = vunpack.c.l.b16 %v928
      %v941 = vunpack.c.l.b16 %v929
      %v942 = vunpack.c.l.b16 %v930
      %v943 = vpack.c.b16 %v940, %v939
      %v944 = vpack.c.b16 %v942, %v941
      %v948 = vsel %vm437, %v926, 0
      %950 = vmatpush.bf16.msra.mxu0 0
      %951 = vmatpush.bf16.msra.mxu0 0
      %952 = vmatpush.bf16.msra.mxu0 0
      %953 = vmatpush.bf16.msra.mxu0 0
      %954 = vmatpush.bf16.msra.mxu0 0
      %955 = vmatpush.bf16.msra.mxu0 0
      %956 = vmatpush.bf16.msra.mxu0 %v944
      %957 = vmatpush.bf16.msra.mxu0 %v943
      %958 = vmatmul.bf16.gmra.mxu0 %v948
      %v959 = vpop.f32.mrf.mxu0
      %v960 = vadd.f32 %v933, %v959
      %v961 = vpop.f32.mrf.mxu0
      %v962 = vadd.f32 %v933, %v961
      %963 = vdwg.mxu0
      %v964 = vadd.f32 %v418, %v960
      %v965 = vadd.f32 %v419, %v962
      %v966 = vsel %vm437, %v964, 0.0
      %967 = vadd.xlane.f32.xlu0 %v966
      %v968 = vpop.xlane.xlu0 %967
      %v969 = vsel %vm437, %v965, 0.0
      %970 = vadd.xlane.f32.xlu0 %v969
      %v971 = vpop.xlane.xlu0 %970
      %v972 = vrcp.pop 32.0
      %v973 = vmul.f32 32.0, %v972
      %v974 = vsub.f32 1.0, %v973
      %v975 = vmul.f32 %v972, %v974
      %v976 = vadd.f32 %v972, %v975
      %vm977 = vweird.f32 %v972
      %v978 = vsel %vm977, %v972, %v976
      %v979 = vmul.f32 %v968, %v978
      %v980 = vmul.f32 %v971, %v978
      %v981 = vsub.f32 %v964, %v979
      %v982 = vsub.f32 %v965, %v980
      %v983 = vmul.f32 %v981, %v981
      %v984 = vmul.f32 %v982, %v982
      %v985 = vsel %vm437, %v983, 0.0
      %986 = vadd.xlane.f32.xlu0 %v985
      %v987 = vpop.xlane.xlu0 %986
      %v988 = vsel %vm437, %v984, 0.0
      %989 = vadd.xlane.f32.xlu0 %v988
      %v990 = vpop.xlane.xlu0 %989
      %v991 = vmul.f32 %v987, %v978
      %v992 = vmul.f32 %v990, %v978
      %v993 = vadd.f32 %v991, 1e-05
      %v994 = vadd.f32 %v992, 1e-05
      %v995 = vrsqrt.pop %v993
      %v996 = vmul.f32 %v995, %v993
      %v997 = vmul.f32 %v996, %v995
      %v998 = vmul.f32 0.5, %v997
      %v999 = vsub.f32 1.5, %v998
      %v1000 = vmul.f32 %v995, %v999
      %vm1001 = vweird.f32 %v993
      %vm1002 = vweird.f32 %v995
      %vm1003 = vmor %vm1001, %vm1002
      %v1004 = vsel %vm1003, %v995, %v1000
      %v1005 = vrsqrt.pop %v994
      %v1006 = vmul.f32 %v1005, %v994
      %v1007 = vmul.f32 %v1006, %v1005
      %v1008 = vmul.f32 0.5, %v1007
      %v1009 = vsub.f32 1.5, %v1008
      %v1010 = vmul.f32 %v1005, %v1009
      %vm1011 = vweird.f32 %v994
      %vm1012 = vweird.f32 %v1005
      %vm1013 = vmor %vm1011, %vm1012
      %v1014 = vsel %vm1013, %v1005, %v1010
      %v1015 = vmul.f32 %v981, %v1004
      %v1016 = vmul.f32 %v982, %v1014
      %v1017 = vld [vmem:[%s8] sm:$0x1]
      %v1019 = vperm.slane %v1017, 0
      %v1021 = vmul.f32 %v1015, %v1019
      %v1022 = vmul.f32 %v1016, %v1019
      %v1023 = vld [vmem:[%s9] sm:$0x1]
      %v1025 = vperm.slane %v1023, 0
      %v1027 = vadd.f32 %v1021, %v1025
      %v1028 = vadd.f32 %v1022, %v1025
      %v1029 = vpack.c.bf16 %v1028, %v1027
      %v1030 = vld [vmem:[%s4] sm:$0xf]
      %v1031 = vld [vmem:[%s4 + $0x4] sm:$0xf]
      %v1032 = vld [vmem:[%s4 + $0x8] sm:$0xf]
      %v1033 = vld [vmem:[%s4 + $0xc] sm:$0xf]
      %v1034 = vld [vmem:[%s5] sm:$0x1]
      %v1036 = vperm.slane %v1034, 0
      %v1042 = vunpack.c.l.b16 %v1030
      %v1043 = vunpack.c.l.b16 %v1031
      %v1044 = vunpack.c.l.b16 %v1032
      %v1045 = vunpack.c.l.b16 %v1033
      %v1046 = vpack.c.b16 %v1043, %v1042
      %v1047 = vpack.c.b16 %v1045, %v1044
      %v1051 = vsel %vm437, %v1029, 0
      %1053 = vmatpush.bf16.msra.mxu0 0
      %1054 = vmatpush.bf16.msra.mxu0 0
      %1055 = vmatpush.bf16.msra.mxu0 0
      %1056 = vmatpush.bf16.msra.mxu0 0
      %1057 = vmatpush.bf16.msra.mxu0 0
      %1058 = vmatpush.bf16.msra.mxu0 0
      %1059 = vmatpush.bf16.msra.mxu0 %v1047
      %1060 = vmatpush.bf16.msra.mxu0 %v1046
      %1061 = vmatmul.bf16.gmra.mxu0 %v1051
      %v1062 = vpop.f32.mrf.mxu0
      %v1063 = vadd.f32 %v1036, %v1062
      %v1064 = vpop.f32.mrf.mxu0
      %v1065 = vadd.f32 %v1036, %v1064
      %1066 = vdwg.mxu0
      %v1067 = vmax.f32 %v1063, 0.0
      %v1068 = vmax.f32 %v1065, 0.0
      %v1069 = vpack.c.bf16 %v1068, %v1067
      %v1070 = vld [vmem:[%s6] sm:$0xf]
      %v1071 = vld [vmem:[%s6 + $0x4] sm:$0xf]
      %v1072 = vld [vmem:[%s6 + $0x8] sm:$0xf]
      %v1073 = vld [vmem:[%s6 + $0xc] sm:$0xf]
      %v1074 = vld [vmem:[%s6 + $0x10] sm:$0xf]
      %v1075 = vld [vmem:[%s6 + $0x14] sm:$0xf]
      %v1076 = vld [vmem:[%s6 + $0x18] sm:$0xf]
      %v1077 = vld [vmem:[%s6 + $0x1c] sm:$0xf]
      %v1078 = vld [vmem:[%s7] sm:$0x1]
      %v1080 = vperm.slane %v1078, 0
      %v1090 = vunpack.c.l.b16 %v1070
      %v1091 = vunpack.c.l.b16 %v1071
      %v1092 = vunpack.c.l.b16 %v1072
      %v1093 = vunpack.c.l.b16 %v1073
      %v1094 = vunpack.c.l.b16 %v1074
      %v1095 = vunpack.c.l.b16 %v1075
      %v1096 = vunpack.c.l.b16 %v1076
      %v1097 = vunpack.c.l.b16 %v1077
      %v1098 = vpack.c.b16 %v1091, %v1090
      %v1099 = vpack.c.b16 %v1093, %v1092
      %v1100 = vpack.c.b16 %v1095, %v1094
      %v1101 = vpack.c.b16 %v1097, %v1096
      %vm1106 = vcmask 523264
      %v1108 = vsel %vm1106, %v1069, 0
      %1110 = vmatpush.bf16.msra.mxu0 0
      %1111 = vmatpush.bf16.msra.mxu0 0
      %1112 = vmatpush.bf16.msra.mxu0 0
      %1113 = vmatpush.bf16.msra.mxu0 0
      %1114 = vmatpush.bf16.msra.mxu0 %v1101
      %1115 = vmatpush.bf16.msra.mxu0 %v1100
      %1116 = vmatpush.bf16.msra.mxu0 %v1099
      %1117 = vmatpush.bf16.msra.mxu0 %v1098
      %1118 = vmatmul.bf16.gmra.mxu0 %v1108
      %v1119 = vpop.f32.mrf.mxu0
      %v1120 = vadd.f32 %v1080, %v1119
      %v1121 = vpop.f32.mrf.mxu0
      %v1122 = vadd.f32 %v1080, %v1121
      %1123 = vdwg.mxu0
      %v1124 = vadd.f32 %v1027, %v1120
      %v1125 = vadd.f32 %v1028, %v1122
      %v1126 = vsel %vm437, %v1124, 0.0
      %1127 = vadd.xlane.f32.xlu0 %v1126
      %v1128 = vpop.xlane.xlu0 %1127
      %v1129 = vsel %vm437, %v1125, 0.0
      %1130 = vadd.xlane.f32.xlu0 %v1129
      %v1131 = vpop.xlane.xlu0 %1130
      %v1132 = vmul.f32 %v1128, %v978
      %v1133 = vmul.f32 %v1131, %v978
      %v1134 = vsub.f32 %v1124, %v1132
      %v1135 = vsub.f32 %v1125, %v1133
      %v1136 = vmul.f32 %v1134, %v1134
      %v1137 = vmul.f32 %v1135, %v1135
      %v1138 = vsel %vm437, %v1136, 0.0
      %1139 = vadd.xlane.f32.xlu0 %v1138
      %v1140 = vpop.xlane.xlu0 %1139
      %v1141 = vsel %vm437, %v1137, 0.0
      %1142 = vadd.xlane.f32.xlu0 %v1141
      %v1143 = vpop.xlane.xlu0 %1142
      %v1144 = vmul.f32 %v1140, %v978
      %v1145 = vmul.f32 %v1143, %v978
      %v1146 = vadd.f32 %v1144, 1e-05
      %v1147 = vadd.f32 %v1145, 1e-05
      %v1148 = vrsqrt.pop %v1146
      %v1149 = vmul.f32 %v1148, %v1146
      %v1150 = vmul.f32 %v1149, %v1148
      %v1151 = vmul.f32 0.5, %v1150
      %v1152 = vsub.f32 1.5, %v1151
      %v1153 = vmul.f32 %v1148, %v1152
      %vm1154 = vweird.f32 %v1146
      %vm1155 = vweird.f32 %v1148
      %vm1156 = vmor %vm1154, %vm1155
      %v1157 = vsel %vm1156, %v1148, %v1153
      %v1158 = vrsqrt.pop %v1147
      %v1159 = vmul.f32 %v1158, %v1147
      %v1160 = vmul.f32 %v1159, %v1158
      %v1161 = vmul.f32 0.5, %v1160
      %v1162 = vsub.f32 1.5, %v1161
      %v1163 = vmul.f32 %v1158, %v1162
      %vm1164 = vweird.f32 %v1147
      %vm1165 = vweird.f32 %v1158
      %vm1166 = vmor %vm1164, %vm1165
      %v1167 = vsel %vm1166, %v1158, %v1163
      %v1168 = vmul.f32 %v1134, %v1157
      %v1169 = vmul.f32 %v1135, %v1167
      %v1170 = vld [vmem:[%s10] sm:$0x1]
      %v1172 = vperm.slane %v1170, 0
      %v1174 = vmul.f32 %v1168, %v1172
      %v1175 = vmul.f32 %v1169, %v1172
      %v1176 = vld [vmem:[%s11] sm:$0x1]
      %v1178 = vperm.slane %v1176, 0
      %v1180 = vadd.f32 %v1174, %v1178
      %v1181 = vadd.f32 %v1175, %v1178
      %1182 = vst.msk [vmem:[%s415] sm:$0xff] %vm437, %v1180
      %1183 = vst.msk [vmem:[%s415 + $0x8] sm:$0xff] %vm437, %v1181
      %s1184 = smul.u32 2, %s23
      %p1185 = scmp.lt.s32.totalorder %s1184, 3
      %s1186 = scalar_select %p1185, %s1184, 3
      %s1187 = smul.addr %s1186, 8
      %s1188 = scalar_lea.vmem %s12, %s1187
      // Predicated region
      $region69: #{model_forward.5} parent=67 // pred_check
        %p1189 = pneg %p298
      $region70: #{model_forward.5} parent=67 // pred_check_branch
        %1191 = sbr.rel (%p1189) target = $region72
      $region71: #{model_forward.5} parent=67 // pred_region
        %s1192 = smul.u32 2, %s23
      $region72: #{model_forward.5} parent=67 // pred_fallthru
        _
    $region68: #{model_forward.5} parent=5 // pred_fallthru
      _
    %p1193 = scmp.le.s32.totalorder 2, %s18
    // Predicated region
    $region73: #{model_forward.5} parent=5 // pred_check
      %p1194 = pneg %p1193
    $region74: #{model_forward.5} parent=5 // pred_check_branch
      %1196 = sbr.rel (%p1194) target = $region76
    $region75: #{model_forward.5} parent=5 // pred_region
      %s1197 = ssub.s32 %s18, 2
      // Predicated region
      $region77: #{model_forward.5} parent=75 // pred_check
        %p1198 = pneg %p304
      $region78: #{model_forward.5} parent=75 // pred_check_branch
        %1200 = sbr.rel (%p1198) target = $region80
      $region79: #{model_forward.5} parent=75 // pred_region
        %s1201 = smul.u32 2, %s24
        %p1202 = scmp.lt.s32.totalorder %s1201, 3
        %s1203 = scalar_select %p1202, %s1201, 3
        %s1204 = smul.addr %s1203, 8
        %s1205 = scalar_lea.vmem %s12, %s1204
      $region80: #{model_forward.5} parent=75 // pred_fallthru
        _
    $region76: #{model_forward.5} parent=5 // pred_fallthru
      _
  $region6: #{model_forward.5} parent=0 // loop_footer
    %s22 = sadd.s32 1, %s18
  $region7: #{model_forward.5} parent=0 // loop_footer_branch
    %17 = sbr.rel target = $region3
  $region8: #{model_forward.5} parent=0 // loop_exit
    _

</llo_original>
